<compile_context>
chip_gen: v5e
topology: v5e:2x2
jax: 0.10.0
libtpu: 0.0.40
codegen_flags: <defaults>
</compile_context>

<pallas_src>
import jax
import jax.numpy as jnp
from jax import lax
from jax.experimental import pallas as pl
from jax.experimental.pallas import tpu as pltpu


def _tennis_mlp_kernel(x_ref,
                       w1_ref, b1_ref,
                       w2_ref, b2_ref,
                       w3_ref, b3_ref,
                       w4_ref, b4_ref,
                       w5_ref, b5_ref,
                       out_ref):
    """Fused 5-layer MLP forward for one batch tile.

    x_ref holds the tile in its natural [batch_tile, F] layout.  The first
    matmul contracts the F axis of both operands (W1 @ x^T), so all
    activations live transposed as [features, batch_tile] with the batch on
    the lane axis; every intermediate and the (1, T) output are lane-dense.
    """
    x = x_ref[...]                                        # (T, F) f32

    # Layer 1: W1 (128, F) contracted against x (T, F) over F -> (128, T).
    h = lax.dot_general(
        w1_ref[...], x,
        dimension_numbers=(((1,), (1,)), ((), ())),
        preferred_element_type=jnp.float32,
        precision=lax.Precision.HIGHEST)
    h = jnp.maximum(h + b1_ref[...], 0.0)                 # (128, T)

    def hidden(h_in, w_ref, b_ref):
        a = jnp.dot(w_ref[...], h_in,
                    preferred_element_type=jnp.float32,
                    precision=lax.Precision.HIGHEST) + b_ref[...]
        return jnp.maximum(a, 0.0)

    # Linear(128,64)+ReLU, Linear(64,32)+ReLU, Linear(32,16)+ReLU.
    # (Dropouts are eval-mode identity.)
    h = hidden(h, w2_ref, b2_ref)                         # (64, T)
    h = hidden(h, w3_ref, b3_ref)                         # (32, T)
    h = hidden(h, w4_ref, b4_ref)                         # (16, T)

    # Final Linear(16, 1): VPU multiply + sublane (XLU) reduce instead of an
    # M=1 MXU pass.  w5 is a [16, 1] column broadcast over lanes.
    logits = jnp.sum(w5_ref[...] * h, axis=0, keepdims=True) + b5_ref[...]  # (1, T)

    # Exact sigmoid: EUP exp + f32 divide (no approximate reciprocal).
    out_ref[...] = 1.0 / (1.0 + jnp.exp(-logits))


def _pick_batch_tile(batch):
    """Batch tile on the lane axis (multiple of 128).

    Small batches: a single (possibly ragged) grid step -- per-step pipeline
    overhead dominates, so don't split.  Large batches: cap the tile at 4096
    so f32 intermediates stay a few MiB (comfortable inside v7x's 64 MiB VMEM)
    while keeping >= 2 grid steps so dimension_semantics=("parallel",) can
    feed both v7x TensorCores.
    """
    cap = 4096
    if batch <= cap:
        return max(128, ((batch + 127) // 128) * 128)
    for tile in (4096, 2048, 1024):
        if batch >= 2 * tile:
            return tile
    return 1024


def tennis_net_forward(x, kernel_params, *, batch_tile=None):
    """x: [B, F] float32 -> [B, 1] float32 win probabilities (eval mode)."""
    (w1, b1), (w2, b2), (w3, b3), (w4, b4), (w5, b5) = kernel_params
    B, F = x.shape
    if batch_tile is None:
        batch_tile = _pick_batch_tile(B)
    assert batch_tile % 128 == 0, "batch_tile must be a multiple of 128"

    grid = (pl.cdiv(B, batch_tile),)   # ragged tail instead of jnp.pad

    rep = lambda i: (0, 0)             # weights/biases: same block every step

    dims = (F, 128, 64, 32, 16, 1)
    flops = 2 * B * sum(dims[i] * dims[i + 1] for i in range(5))
    n_param = sum(dims[i] * dims[i + 1] + dims[i + 1] for i in range(5))
    cost = pl.CostEstimate(flops=flops,
                           transcendentals=B,
                           bytes_accessed=4 * (B * F + B + n_param))

    out = pl.pallas_call(
        _tennis_mlp_kernel,
        out_shape=jax.ShapeDtypeStruct((1, B), jnp.float32),
        grid_spec=pltpu.PrefetchScalarGridSpec(
            num_scalar_prefetch=0,
            grid=grid,
            in_specs=[
                pl.BlockSpec((batch_tile, F), lambda i: (i, 0)),   # x tile (natural layout)
                pl.BlockSpec(w1.shape, rep), pl.BlockSpec(b1.shape, rep),
                pl.BlockSpec(w2.shape, rep), pl.BlockSpec(b2.shape, rep),
                pl.BlockSpec(w3.shape, rep), pl.BlockSpec(b3.shape, rep),
                pl.BlockSpec(w4.shape, rep), pl.BlockSpec(b4.shape, rep),
                pl.BlockSpec(w5.shape, rep), pl.BlockSpec(b5.shape, rep),
            ],
            out_specs=pl.BlockSpec((1, batch_tile), lambda i: (0, i)),
        ),
        compiler_params=pltpu.CompilerParams(
            dimension_semantics=("parallel",),
            vmem_limit_bytes=48 * 1024 * 1024,
        ),
        cost_estimate=cost,
    )(x, w1, b1, w2, b2, w3, b3, w4, b4, w5, b5)

    # Lane-dense (1, B) kernel output -> [B, 1] (pure layout op in the wrapper).
    return jnp.transpose(out)


def init_torch_params(key, input_size):
    """Deterministic params in PyTorch nn.Linear layout: W [out, in], b [out]."""
    dims = [input_size, 128, 64, 32, 16, 1]
    params = []
    for i in range(5):
        key, kw, kb = jax.random.split(key, 3)
        bound = 1.0 / jnp.sqrt(jnp.float32(dims[i]))
        w = jax.random.uniform(kw, (dims[i + 1], dims[i]), jnp.float32, -bound, bound)
        b = jax.random.uniform(kb, (dims[i + 1],), jnp.float32, -bound, bound)
        params.append((w, b))
    return params


def prepare_params(torch_params):
    """PyTorch-layout params -> kernel layout (all f32).

    Hidden layers: W [out, in], b [out, 1] (column broadcast over lanes).
    Final layer:   w5 [16, 1] column (VPU multiply + sublane reduce), b5 [1, 1].
    """
    (w1, b1), (w2, b2), (w3, b3), (w4, b4), (w5, b5) = torch_params
    kp = [(w.astype(jnp.float32), b.reshape(-1, 1).astype(jnp.float32))
          for w, b in ((w1, b1), (w2, b2), (w3, b3), (w4, b4))]
    kp.append((jnp.transpose(w5).astype(jnp.float32),
               b5.reshape(1, 1).astype(jnp.float32)))
    return tuple(kp)


def reference_forward(x, torch_params):
    """Pure-f32 JAX reference matching the PyTorch TennisNet (eval mode)."""
    h = x
    for w, b in torch_params[:-1]:
        h = jnp.maximum(
            jnp.dot(h, jnp.transpose(w), precision=lax.Precision.HIGHEST) + b[None, :],
            0.0)
    w5, b5 = torch_params[-1]
    logits = jnp.dot(h, jnp.transpose(w5), precision=lax.Precision.HIGHEST) + b5[None, :]
    return jax.nn.sigmoid(logits)


if __name__ == "__main__":
    key = jax.random.PRNGKey(0)
    k1, k2, kp = jax.random.split(key, 3)

    input_size = 16  # number of scaled numeric features

    torch_params = init_torch_params(kp, input_size)
    kernel_params = prepare_params(torch_params)

    fwd = jax.jit(tennis_net_forward, static_argnames=("batch_tile",))

    # 1) Small smoke test: a single (ragged) grid step.
    x_small = jax.random.normal(k1, (8, input_size), jnp.float32)
    out_small = jax.block_until_ready(fwd(x_small, kernel_params))
    ref_small = reference_forward(x_small, torch_params)
    assert out_small.shape == (8, 1), out_small.shape
    assert jnp.allclose(out_small, ref_small, atol=1e-4, rtol=1e-4), (
        out_small, ref_small)

    # 2) Multi-step grid with a ragged tail (300 = 2*128 + 44): exercises the
    #    "parallel" batch axis and masked edge stores.
    x_big = jax.random.normal(k2, (300, input_size), jnp.float32)
    out_big = jax.block_until_ready(fwd(x_big, kernel_params, batch_tile=128))
    ref_big = reference_forward(x_big, torch_params)
    assert out_big.shape == (300, 1), out_big.shape
    assert jnp.allclose(out_big, ref_big, atol=1e-4, rtol=1e-4), (
        float(jnp.max(jnp.abs(out_big - ref_big))))

    print("KERNEL_OK")
</pallas_src>

<mosaic_0001>
module attributes {stable_mosaic.version = 11 : i64} {
  func.func @_tennis_mlp_kernel(%arg0: i32, %arg1: memref<128x16xf32, #tpu.memory_space<vmem>>, %arg2: memref<128x16xf32, #tpu.memory_space<vmem>>, %arg3: memref<128x1xf32, #tpu.memory_space<vmem>>, %arg4: memref<64x128xf32, #tpu.memory_space<vmem>>, %arg5: memref<64x1xf32, #tpu.memory_space<vmem>>, %arg6: memref<32x64xf32, #tpu.memory_space<vmem>>, %arg7: memref<32x1xf32, #tpu.memory_space<vmem>>, %arg8: memref<16x32xf32, #tpu.memory_space<vmem>>, %arg9: memref<16x1xf32, #tpu.memory_space<vmem>>, %arg10: memref<16x1xf32, #tpu.memory_space<vmem>>, %arg11: memref<1x1xf32, #tpu.memory_space<vmem>>, %arg12: memref<1x128xf32, #tpu.memory_space<vmem>>) attributes {dimension_semantics = [#tpu.dimension_semantics<parallel>], iteration_bounds = array<i64: 1>, scalar_prefetch = 0 : i64, scratch_operands = 0 : i64, tpu.core_type = #tpu.core_type<tc>, window_params = [{transform_indices = @transform_0, window_bounds = array<i64: 128, 16>}, {pipeline_mode = #tpu.pipeline_mode<synchronous>, transform_indices = @transform_1, window_bounds = array<i64: 128, 16>}, {pipeline_mode = #tpu.pipeline_mode<synchronous>, transform_indices = @transform_2, window_bounds = array<i64: 128, 1>}, {pipeline_mode = #tpu.pipeline_mode<synchronous>, transform_indices = @transform_3, window_bounds = array<i64: 64, 128>}, {pipeline_mode = #tpu.pipeline_mode<synchronous>, transform_indices = @transform_4, window_bounds = array<i64: 64, 1>}, {pipeline_mode = #tpu.pipeline_mode<synchronous>, transform_indices = @transform_5, window_bounds = array<i64: 32, 64>}, {pipeline_mode = #tpu.pipeline_mode<synchronous>, transform_indices = @transform_6, window_bounds = array<i64: 32, 1>}, {pipeline_mode = #tpu.pipeline_mode<synchronous>, transform_indices = @transform_7, window_bounds = array<i64: 16, 32>}, {pipeline_mode = #tpu.pipeline_mode<synchronous>, transform_indices = @transform_8, window_bounds = array<i64: 16, 1>}, {pipeline_mode = #tpu.pipeline_mode<synchronous>, transform_indices = @transform_9, window_bounds = array<i64: 16, 1>}, {pipeline_mode = #tpu.pipeline_mode<synchronous>, transform_indices = @transform_10, window_bounds = array<i64: 1, 1>}, {transform_indices = @transform_11, window_bounds = array<i64: 1, 128>}]} {
    %c0 = arith.constant 0 : index
    %c0_0 = arith.constant 0 : index
    %0 = vector.load %arg1[%c0, %c0_0] : memref<128x16xf32, #tpu.memory_space<vmem>>, vector<128x16xf32>
    %c0_1 = arith.constant 0 : index
    %c0_2 = arith.constant 0 : index
    %1 = vector.load %arg2[%c0_1, %c0_2] : memref<128x16xf32, #tpu.memory_space<vmem>>, vector<128x16xf32>
    %cst = arith.constant dense<0.000000e+00> : vector<128x128xf32>
    %2 = tpu.matmul %1, %0, %cst {dimension_numbers = #tpu.dot_dimension_numbers<[1], [1], [0], [0], [0, 0, 1, 0], [], []>, precision = #tpu.contract_precision<fp32>} : vector<128x16xf32>, vector<128x16xf32>, vector<128x128xf32> -> vector<128x128xf32>
    %c0_3 = arith.constant 0 : index
    %c0_4 = arith.constant 0 : index
    %3 = vector.load %arg3[%c0_3, %c0_4] : memref<128x1xf32, #tpu.memory_space<vmem>>, vector<128x1xf32>
    %4 = vector.broadcast %3 : vector<128x1xf32> to vector<128x128xf32>
    %5 = arith.addf %2, %4 : vector<128x128xf32>
    %cst_5 = arith.constant 0.000000e+00 : f32
    %6 = vector.broadcast %cst_5 : f32 to vector<128x128xf32>
    %7 = arith.maximumf %5, %6 : vector<128x128xf32>
    %c0_6 = arith.constant 0 : index
    %c0_7 = arith.constant 0 : index
    %8 = vector.load %arg4[%c0_6, %c0_7] : memref<64x128xf32, #tpu.memory_space<vmem>>, vector<64x128xf32>
    %cst_8 = arith.constant dense<0.000000e+00> : vector<64x128xf32>
    %9 = tpu.matmul %8, %7, %cst_8 {dimension_numbers = #tpu.dot_dimension_numbers<[1], [0], [0], [1], [0, 0, 1, 1], [], []>, precision = #tpu.contract_precision<fp32>} : vector<64x128xf32>, vector<128x128xf32>, vector<64x128xf32> -> vector<64x128xf32>
    %c0_9 = arith.constant 0 : index
    %c0_10 = arith.constant 0 : index
    %10 = vector.load %arg5[%c0_9, %c0_10] : memref<64x1xf32, #tpu.memory_space<vmem>>, vector<64x1xf32>
    %11 = vector.broadcast %10 : vector<64x1xf32> to vector<64x128xf32>
    %12 = arith.addf %9, %11 : vector<64x128xf32>
    %cst_11 = arith.constant 0.000000e+00 : f32
    %13 = vector.broadcast %cst_11 : f32 to vector<64x128xf32>
    %14 = arith.maximumf %12, %13 : vector<64x128xf32>
    %c0_12 = arith.constant 0 : index
    %c0_13 = arith.constant 0 : index
    %15 = vector.load %arg6[%c0_12, %c0_13] : memref<32x64xf32, #tpu.memory_space<vmem>>, vector<32x64xf32>
    %cst_14 = arith.constant dense<0.000000e+00> : vector<32x128xf32>
    %16 = tpu.matmul %15, %14, %cst_14 {dimension_numbers = #tpu.dot_dimension_numbers<[1], [0], [0], [1], [0, 0, 1, 1], [], []>, precision = #tpu.contract_precision<fp32>} : vector<32x64xf32>, vector<64x128xf32>, vector<32x128xf32> -> vector<32x128xf32>
    %c0_15 = arith.constant 0 : index
    %c0_16 = arith.constant 0 : index
    %17 = vector.load %arg7[%c0_15, %c0_16] : memref<32x1xf32, #tpu.memory_space<vmem>>, vector<32x1xf32>
    %18 = vector.broadcast %17 : vector<32x1xf32> to vector<32x128xf32>
    %19 = arith.addf %16, %18 : vector<32x128xf32>
    %cst_17 = arith.constant 0.000000e+00 : f32
    %20 = vector.broadcast %cst_17 : f32 to vector<32x128xf32>
    %21 = arith.maximumf %19, %20 : vector<32x128xf32>
    %c0_18 = arith.constant 0 : index
    %c0_19 = arith.constant 0 : index
    %22 = vector.load %arg8[%c0_18, %c0_19] : memref<16x32xf32, #tpu.memory_space<vmem>>, vector<16x32xf32>
    %cst_20 = arith.constant dense<0.000000e+00> : vector<16x128xf32>
    %23 = tpu.matmul %22, %21, %cst_20 {dimension_numbers = #tpu.dot_dimension_numbers<[1], [0], [0], [1], [0, 0, 1, 1], [], []>, precision = #tpu.contract_precision<fp32>} : vector<16x32xf32>, vector<32x128xf32>, vector<16x128xf32> -> vector<16x128xf32>
    %c0_21 = arith.constant 0 : index
    %c0_22 = arith.constant 0 : index
    %24 = vector.load %arg9[%c0_21, %c0_22] : memref<16x1xf32, #tpu.memory_space<vmem>>, vector<16x1xf32>
    %25 = vector.broadcast %24 : vector<16x1xf32> to vector<16x128xf32>
    %26 = arith.addf %23, %25 : vector<16x128xf32>
    %cst_23 = arith.constant 0.000000e+00 : f32
    %27 = vector.broadcast %cst_23 : f32 to vector<16x128xf32>
    %28 = arith.maximumf %26, %27 : vector<16x128xf32>
    %c0_24 = arith.constant 0 : index
    %c0_25 = arith.constant 0 : index
    %29 = vector.load %arg10[%c0_24, %c0_25] : memref<16x1xf32, #tpu.memory_space<vmem>>, vector<16x1xf32>
    %30 = vector.broadcast %29 : vector<16x1xf32> to vector<16x128xf32>
    %31 = arith.mulf %30, %28 : vector<16x128xf32>
    %cst_26 = arith.constant dense<0.000000e+00> : vector<128xf32>
    %32 = vector.multi_reduction <add>, %31, %cst_26 [0] : vector<16x128xf32> to vector<128xf32>
    %33 = vector.shape_cast %32 : vector<128xf32> to vector<1x128xf32>
    %c0_27 = arith.constant 0 : index
    %c0_28 = arith.constant 0 : index
    %34 = vector.load %arg11[%c0_27, %c0_28] : memref<1x1xf32, #tpu.memory_space<vmem>>, vector<1x1xf32>
    %35 = vector.broadcast %34 : vector<1x1xf32> to vector<1x128xf32>
    %36 = arith.addf %33, %35 : vector<1x128xf32>
    %cst_29 = arith.constant 0.000000e+00 : f32
    %37 = vector.broadcast %cst_29 : f32 to vector<1x128xf32>
    %38 = arith.subf %37, %36 : vector<1x128xf32>
    %39 = math.exp %38 : vector<1x128xf32>
    %cst_30 = arith.constant 1.000000e+00 : f32
    %40 = vector.broadcast %cst_30 : f32 to vector<1x128xf32>
    %41 = arith.addf %40, %39 : vector<1x128xf32>
    %cst_31 = arith.constant 1.000000e+00 : f32
    %42 = vector.broadcast %cst_31 : f32 to vector<1x128xf32>
    %43 = arith.divf %42, %41 : vector<1x128xf32>
    %c0_32 = arith.constant 0 : index
    %c0_33 = arith.constant 0 : index
    %44 = vector.load %arg12[%c0_32, %c0_33] : memref<1x128xf32, #tpu.memory_space<vmem>>, vector<1x128xf32>
    tpu.vector_store %arg12[%c0_32, %c0_33], %43 {strides = array<i32>} : memref<1x128xf32, #tpu.memory_space<vmem>>, vector<1x128xf32>,
    return
  }
  func.func @transform_0(%arg0: i32) -> (i32, i32) {
    %c0_i32 = arith.constant 0 : i32
    %c0_i32_0 = arith.constant 0 : i32
    return %arg0, %c0_i32 : i32, i32
  }
  func.func @transform_1(%arg0: i32) -> (i32, i32) {
    %c0_i32 = arith.constant 0 : i32
    %c0_i32_0 = arith.constant 0 : i32
    %c0_i32_1 = arith.constant 0 : i32
    return %c0_i32, %c0_i32_0 : i32, i32
  }
  func.func @transform_2(%arg0: i32) -> (i32, i32) {
    %c0_i32 = arith.constant 0 : i32
    %c0_i32_0 = arith.constant 0 : i32
    %c0_i32_1 = arith.constant 0 : i32
    return %c0_i32, %c0_i32_0 : i32, i32
  }
  func.func @transform_3(%arg0: i32) -> (i32, i32) {
    %c0_i32 = arith.constant 0 : i32
    %c0_i32_0 = arith.constant 0 : i32
    %c0_i32_1 = arith.constant 0 : i32
    return %c0_i32, %c0_i32_0 : i32, i32
  }
  func.func @transform_4(%arg0: i32) -> (i32, i32) {
    %c0_i32 = arith.constant 0 : i32
    %c0_i32_0 = arith.constant 0 : i32
    %c0_i32_1 = arith.constant 0 : i32
    return %c0_i32, %c0_i32_0 : i32, i32
  }
  func.func @transform_5(%arg0: i32) -> (i32, i32) {
    %c0_i32 = arith.constant 0 : i32
    %c0_i32_0 = arith.constant 0 : i32
    %c0_i32_1 = arith.constant 0 : i32
    return %c0_i32, %c0_i32_0 : i32, i32
  }
  func.func @transform_6(%arg0: i32) -> (i32, i32) {
    %c0_i32 = arith.constant 0 : i32
    %c0_i32_0 = arith.constant 0 : i32
    %c0_i32_1 = arith.constant 0 : i32
    return %c0_i32, %c0_i32_0 : i32, i32
  }
  func.func @transform_7(%arg0: i32) -> (i32, i32) {
    %c0_i32 = arith.constant 0 : i32
    %c0_i32_0 = arith.constant 0 : i32
    %c0_i32_1 = arith.constant 0 : i32
    return %c0_i32, %c0_i32_0 : i32, i32
  }
  func.func @transform_8(%arg0: i32) -> (i32, i32) {
    %c0_i32 = arith.constant 0 : i32
    %c0_i32_0 = arith.constant 0 : i32
    %c0_i32_1 = arith.constant 0 : i32
    return %c0_i32, %c0_i32_0 : i32, i32
  }
  func.func @transform_9(%arg0: i32) -> (i32, i32) {
    %c0_i32 = arith.constant 0 : i32
    %c0_i32_0 = arith.constant 0 : i32
    %c0_i32_1 = arith.constant 0 : i32
    return %c0_i32, %c0_i32_0 : i32, i32
  }
  func.func @transform_10(%arg0: i32) -> (i32, i32) {
    %c0_i32 = arith.constant 0 : i32
    %c0_i32_0 = arith.constant 0 : i32
    %c0_i32_1 = arith.constant 0 : i32
    return %c0_i32, %c0_i32_0 : i32, i32
  }
  func.func @transform_11(%arg0: i32) -> (i32, i32) {
    %c0_i32 = arith.constant 0 : i32
    %c0_i32_0 = arith.constant 0 : i32
    return %c0_i32, %arg0 : i32, i32
  }
}

</mosaic_0001>

<llo_original>
// kernel: tennis_net_forward.1
$region0: #{tennis_net_forward.1}
  #allocation0 [shape = 'u32[]', space=smem, size = 0x4, offset = 0x4, fixed_abs, tag = 'smem constant byte address 0x4 - core index']
  #allocation1 [shape = 'u32[72,128]{1,0:T(1,128)}', space=vmem, size = 0x9000, scoped, tag = 'internal scratch']
  #allocation2 [shape = 'f32[1,1]{1,0:T(1,128)S(1)}', space=vmem, size = 0x200, scoped, tag = 'scoped memory for tennis_net_forward.1']
  %s0 = inlined_call_operand.vmem [shape: f32[8,16], index: 0, kind: input, shape index: {}]
  %s1 = inlined_call_operand.vmem [shape: f32[128,16], index: 1, kind: input, shape index: {}]
  %s2 = inlined_call_operand.vmem [shape: f32[128,1], index: 2, kind: input, shape index: {}]
  %s3 = inlined_call_operand.vmem [shape: f32[64,128], index: 3, kind: input, shape index: {}]
  %s4 = inlined_call_operand.vmem [shape: f32[64,1], index: 4, kind: input, shape index: {}]
  %s5 = inlined_call_operand.vmem [shape: f32[32,64], index: 5, kind: input, shape index: {}]
  %s6 = inlined_call_operand.vmem [shape: f32[32,1], index: 6, kind: input, shape index: {}]
  %s7 = inlined_call_operand.vmem [shape: f32[16,32], index: 7, kind: input, shape index: {}]
  %s8 = inlined_call_operand.vmem [shape: f32[16,1], index: 8, kind: input, shape index: {}]
  %s9 = inlined_call_operand.vmem [shape: f32[16,1], index: 9, kind: input, shape index: {}]
  %s10 = inlined_call_operand.<no memory space> [shape: f32[1,1], index: 10, kind: input, shape index: {}]
  %s11 = inlined_call_operand.hbm [shape: f32[1,8], index: 11, kind: output, shape index: {}]
  %s12 = sld [smem:[#allocation0]]
  $region54: #{tennis_net_forward.1} parent=0
    _
  %s14 = ssub.s32 1, %s12
  %s15 = scalar_select 0, %s14, %s12
  %v16 = vstv %s10
  %17 = vst [vmem:[#allocation2] sm:$0x1] %v16
  $region1: #{tennis_net_forward.1} parent=0
    #allocation3 [shape = 'u8[512]{0}', space=vmem, size = 0x400, scoped, tag = 'output window, operand 0, single buffered']
    #allocation4 [shape = 's32[1]{0}', space=sflag, size = 0x4, scoped, tag = 'scoped memory for tennis_net_forward.1']
    %18 = vsyncpa [#allocation4], 0
    // Predicated region
    $region2: #{tennis_net_forward.1} parent=1 // pred_check
      _
    $region3: #{tennis_net_forward.1} parent=1 // pred_check_branch
      %20 = sbr.rel (0) target = $region5
    $region4: #{tennis_net_forward.1} parent=1 // pred_region
      _
    $region5: #{tennis_net_forward.1} parent=1 // pred_fallthru
      _
    // Predicated region
    $region6: #{tennis_net_forward.1} parent=1 // pred_check
      _
    $region7: #{tennis_net_forward.1} parent=1 // pred_check_branch
      %22 = sbr.rel (0) target = $region9
    $region8: #{tennis_net_forward.1} parent=1 // pred_region
      _
    $region9: #{tennis_net_forward.1} parent=1 // pred_fallthru
      _
    // Predicated region
    $region10: #{tennis_net_forward.1} parent=1 // pred_check
      _
    $region11: #{tennis_net_forward.1} parent=1 // pred_check_branch
      %24 = sbr.rel (0) target = $region13
    $region12: #{tennis_net_forward.1} parent=1 // pred_region
      _
    $region13: #{tennis_net_forward.1} parent=1 // pred_fallthru
      _
    // Predicated region
    $region14: #{tennis_net_forward.1} parent=1 // pred_check
      _
    $region15: #{tennis_net_forward.1} parent=1 // pred_check_branch
      %26 = sbr.rel (0) target = $region17
    $region16: #{tennis_net_forward.1} parent=1 // pred_region
      _
    $region17: #{tennis_net_forward.1} parent=1 // pred_fallthru
      _
    // Predicated region
    $region18: #{tennis_net_forward.1} parent=1 // pred_check
      _
    $region19: #{tennis_net_forward.1} parent=1 // pred_check_branch
      %28 = sbr.rel (0) target = $region21
    $region20: #{tennis_net_forward.1} parent=1 // pred_region
      _
    $region21: #{tennis_net_forward.1} parent=1 // pred_fallthru
      _
    // Predicated region
    $region22: #{tennis_net_forward.1} parent=1 // pred_check
      _
    $region23: #{tennis_net_forward.1} parent=1 // pred_check_branch
      %30 = sbr.rel (0) target = $region25
    $region24: #{tennis_net_forward.1} parent=1 // pred_region
      _
    $region25: #{tennis_net_forward.1} parent=1 // pred_fallthru
      _
    // Predicated region
    $region26: #{tennis_net_forward.1} parent=1 // pred_check
      _
    $region27: #{tennis_net_forward.1} parent=1 // pred_check_branch
      %32 = sbr.rel (0) target = $region29
    $region28: #{tennis_net_forward.1} parent=1 // pred_region
      _
    $region29: #{tennis_net_forward.1} parent=1 // pred_fallthru
      _
    // Predicated region
    $region30: #{tennis_net_forward.1} parent=1 // pred_check
      _
    $region31: #{tennis_net_forward.1} parent=1 // pred_check_branch
      %34 = sbr.rel (0) target = $region33
    $region32: #{tennis_net_forward.1} parent=1 // pred_region
      _
    $region33: #{tennis_net_forward.1} parent=1 // pred_fallthru
      _
    // Predicated region
    $region34: #{tennis_net_forward.1} parent=1 // pred_check
      _
    $region35: #{tennis_net_forward.1} parent=1 // pred_check_branch
      %36 = sbr.rel (0) target = $region37
    $region36: #{tennis_net_forward.1} parent=1 // pred_region
      _
    $region37: #{tennis_net_forward.1} parent=1 // pred_fallthru
      _
    // Predicated region
    $region38: #{tennis_net_forward.1} parent=1 // pred_check
      _
    $region39: #{tennis_net_forward.1} parent=1 // pred_check_branch
      %38 = sbr.rel (0) target = $region41
    $region40: #{tennis_net_forward.1} parent=1 // pred_region
      _
    $region41: #{tennis_net_forward.1} parent=1 // pred_fallthru
      _
    // Predicated region
    $region42: #{tennis_net_forward.1} parent=1 // pred_check
      _
    $region43: #{tennis_net_forward.1} parent=1 // pred_check_branch
      %40 = sbr.rel (0) target = $region45
    $region44: #{tennis_net_forward.1} parent=1 // pred_region
      _
    $region45: #{tennis_net_forward.1} parent=1 // pred_fallthru
      _
    %v41 = vld [vmem:[%s0] sm:$0xff]
    %v42 = vld [vmem:[%s0 + $0x8] sm:$0xff]
    %v43 = vld [vmem:[%s0 + $0x10] sm:$0xff]
    %v44 = vld [vmem:[%s0 + $0x18] sm:$0xff]
    %v45 = vld [vmem:[%s0 + $0x20] sm:$0xff]
    %v46 = vld [vmem:[%s0 + $0x28] sm:$0xff]
    %v47 = vld [vmem:[%s0 + $0x30] sm:$0xff]
    %v48 = vld [vmem:[%s0 + $0x38] sm:$0xff]
    %v49 = vld [vmem:[%s0 + $0x40] sm:$0xff]
    %v50 = vld [vmem:[%s0 + $0x48] sm:$0xff]
    %v51 = vld [vmem:[%s0 + $0x50] sm:$0xff]
    %v52 = vld [vmem:[%s0 + $0x58] sm:$0xff]
    %v53 = vld [vmem:[%s0 + $0x60] sm:$0xff]
    %v54 = vld [vmem:[%s0 + $0x68] sm:$0xff]
    %v55 = vld [vmem:[%s0 + $0x70] sm:$0xff]
    %v56 = vld [vmem:[%s0 + $0x78] sm:$0xff]
    %v57 = vld [vmem:[%s1] sm:$0xff]
    %v58 = vld [vmem:[%s1 + $0x8] sm:$0xff]
    %v59 = vld [vmem:[%s1 + $0x10] sm:$0xff]
    %v60 = vld [vmem:[%s1 + $0x18] sm:$0xff]
    %v61 = vld [vmem:[%s1 + $0x20] sm:$0xff]
    %v62 = vld [vmem:[%s1 + $0x28] sm:$0xff]
    %v63 = vld [vmem:[%s1 + $0x30] sm:$0xff]
    %v64 = vld [vmem:[%s1 + $0x38] sm:$0xff]
    %v65 = vld [vmem:[%s1 + $0x40] sm:$0xff]
    %v66 = vld [vmem:[%s1 + $0x48] sm:$0xff]
    %v67 = vld [vmem:[%s1 + $0x50] sm:$0xff]
    %v68 = vld [vmem:[%s1 + $0x58] sm:$0xff]
    %v69 = vld [vmem:[%s1 + $0x60] sm:$0xff]
    %v70 = vld [vmem:[%s1 + $0x68] sm:$0xff]
    %v71 = vld [vmem:[%s1 + $0x70] sm:$0xff]
    %v72 = vld [vmem:[%s1 + $0x78] sm:$0xff]
    %v73 = vld [vmem:[%s2] sm:$0xff]
    %v74 = vld [vmem:[%s2 + $0x8] sm:$0xff]
    %v75 = vld [vmem:[%s2 + $0x10] sm:$0xff]
    %v76 = vld [vmem:[%s2 + $0x18] sm:$0xff]
    %v77 = vld [vmem:[%s2 + $0x20] sm:$0xff]
    %v78 = vld [vmem:[%s2 + $0x28] sm:$0xff]
    %v79 = vld [vmem:[%s2 + $0x30] sm:$0xff]
    %v80 = vld [vmem:[%s2 + $0x38] sm:$0xff]
    %v81 = vld [vmem:[%s2 + $0x40] sm:$0xff]
    %v82 = vld [vmem:[%s2 + $0x48] sm:$0xff]
    %v83 = vld [vmem:[%s2 + $0x50] sm:$0xff]
    %v84 = vld [vmem:[%s2 + $0x58] sm:$0xff]
    %v85 = vld [vmem:[%s2 + $0x60] sm:$0xff]
    %v86 = vld [vmem:[%s2 + $0x68] sm:$0xff]
    %v87 = vld [vmem:[%s2 + $0x70] sm:$0xff]
    %v88 = vld [vmem:[%s2 + $0x78] sm:$0xff]
    %90 = vset.pattern.permute.xlu0 0
    %91 = vperm.xlu0 %90, %v73
    %v92 = vpop.permute.xlu0 %91
    %95 = vset.pattern.permute.xlu0 0
    %96 = vperm.xlu0 %95, %v74
    %v97 = vpop.permute.xlu0 %96
    %100 = vset.pattern.permute.xlu0 0
    %101 = vperm.xlu0 %100, %v75
    %v102 = vpop.permute.xlu0 %101
    %105 = vset.pattern.permute.xlu0 0
    %106 = vperm.xlu0 %105, %v76
    %v107 = vpop.permute.xlu0 %106
    %110 = vset.pattern.permute.xlu0 0
    %111 = vperm.xlu0 %110, %v77
    %v112 = vpop.permute.xlu0 %111
    %115 = vset.pattern.permute.xlu0 0
    %116 = vperm.xlu0 %115, %v78
    %v117 = vpop.permute.xlu0 %116
    %120 = vset.pattern.permute.xlu0 0
    %121 = vperm.xlu0 %120, %v79
    %v122 = vpop.permute.xlu0 %121
    %125 = vset.pattern.permute.xlu0 0
    %126 = vperm.xlu0 %125, %v80
    %v127 = vpop.permute.xlu0 %126
    %130 = vset.pattern.permute.xlu0 0
    %131 = vperm.xlu0 %130, %v81
    %v132 = vpop.permute.xlu0 %131
    %135 = vset.pattern.permute.xlu0 0
    %136 = vperm.xlu0 %135, %v82
    %v137 = vpop.permute.xlu0 %136
    %140 = vset.pattern.permute.xlu0 0
    %141 = vperm.xlu0 %140, %v83
    %v142 = vpop.permute.xlu0 %141
    %145 = vset.pattern.permute.xlu0 0
    %146 = vperm.xlu0 %145, %v84
    %v147 = vpop.permute.xlu0 %146
    %150 = vset.pattern.permute.xlu0 0
    %151 = vperm.xlu0 %150, %v85
    %v152 = vpop.permute.xlu0 %151
    %155 = vset.pattern.permute.xlu0 0
    %156 = vperm.xlu0 %155, %v86
    %v157 = vpop.permute.xlu0 %156
    %160 = vset.pattern.permute.xlu0 0
    %161 = vperm.xlu0 %160, %v87
    %v162 = vpop.permute.xlu0 %161
    %165 = vset.pattern.permute.xlu0 0
    %166 = vperm.xlu0 %165, %v88
    %v167 = vpop.permute.xlu0 %166
    %vm169 = vcmask 130048
    %v171 = vsel %vm169, %v57, 0
    %v174 = vsel %vm169, %v58, 0
    %v177 = vsel %vm169, %v59, 0
    %v180 = vsel %vm169, %v60, 0
    %v183 = vsel %vm169, %v61, 0
    %v186 = vsel %vm169, %v62, 0
    %v189 = vsel %vm169, %v63, 0
    %v192 = vsel %vm169, %v64, 0
    %v195 = vsel %vm169, %v65, 0
    %v198 = vsel %vm169, %v66, 0
    %v201 = vsel %vm169, %v67, 0
    %v204 = vsel %vm169, %v68, 0
    %v207 = vsel %vm169, %v69, 0
    %v210 = vsel %vm169, %v70, 0
    %v213 = vsel %vm169, %v71, 0
    %v216 = vsel %vm169, %v72, 0
    %v219 = vsel %vm169, %v41, 0
    %v222 = vsel %vm169, %v42, 0
    %v225 = vsel %vm169, %v43, 0
    %v228 = vsel %vm169, %v44, 0
    %v231 = vsel %vm169, %v45, 0
    %v234 = vsel %vm169, %v46, 0
    %v237 = vsel %vm169, %v47, 0
    %v240 = vsel %vm169, %v48, 0
    %v243 = vsel %vm169, %v49, 0
    %v246 = vsel %vm169, %v50, 0
    %v249 = vsel %vm169, %v51, 0
    %v252 = vsel %vm169, %v52, 0
    %v255 = vsel %vm169, %v53, 0
    %v258 = vsel %vm169, %v54, 0
    %v261 = vsel %vm169, %v55, 0
    %v264 = vsel %vm169, %v56, 0
    %v266 = vand.u32 %v264, 4294901760
    %267 = vmatpush.xpose.msra.mxu0 %v266
    %v268 = vand.u32 %v261, 4294901760
    %269 = vmatpush.xpose.msra.mxu0 %v268
    %v270 = vand.u32 %v258, 4294901760
    %271 = vmatpush.xpose.msra.mxu0 %v270
    %v272 = vand.u32 %v255, 4294901760
    %273 = vmatpush.xpose.msra.mxu0 %v272
    %v274 = vand.u32 %v252, 4294901760
    %275 = vmatpush.xpose.msra.mxu0 %v274
    %v276 = vand.u32 %v249, 4294901760
    %277 = vmatpush.xpose.msra.mxu0 %v276
    %v278 = vand.u32 %v246, 4294901760
    %279 = vmatpush.xpose.msra.mxu0 %v278
    %v280 = vand.u32 %v243, 4294901760
    %281 = vmatpush.xpose.msra.mxu0 %v280
    %v282 = vand.u32 %v240, 4294901760
    %283 = vmatpush.xpose.msra.mxu0 %v282
    %v284 = vand.u32 %v237, 4294901760
    %285 = vmatpush.xpose.msra.mxu0 %v284
    %v286 = vand.u32 %v234, 4294901760
    %287 = vmatpush.xpose.msra.mxu0 %v286
    %v288 = vand.u32 %v231, 4294901760
    %289 = vmatpush.xpose.msra.mxu0 %v288
    %v290 = vand.u32 %v228, 4294901760
    %291 = vmatpush.xpose.msra.mxu0 %v290
    %v292 = vand.u32 %v225, 4294901760
    %293 = vmatpush.xpose.msra.mxu0 %v292
    %v294 = vand.u32 %v222, 4294901760
    %295 = vmatpush.xpose.msra.mxu0 %v294
    %v296 = vand.u32 %v219, 4294901760
    %297 = vmatpush.xpose.msra.mxu0 %v296
    %v298 = vand.u32 %v171, 4294901760
    %v299 = vsub.f32 %v171, %v298
    %v300 = vand.u32 %v299, 4294901760
    %v301 = vsub.f32 %v299, %v300
    %v302 = vand.u32 %v301, 4294901760
    %303 = vmatmul.f32.gmra.mxu0 %v302
    %v304 = vpop.f32.mrf.mxu0
    %v305 = vadd.f32 %v92, %v304
    %v306 = vand.u32 %v174, 4294901760
    %v307 = vsub.f32 %v174, %v306
    %v308 = vand.u32 %v307, 4294901760
    %v309 = vsub.f32 %v307, %v308
    %v310 = vand.u32 %v309, 4294901760
    %311 = vmatmul.f32.gmra.mxu0 %v310
    %v312 = vpop.f32.mrf.mxu0
    %v313 = vadd.f32 %v97, %v312
    %v314 = vand.u32 %v177, 4294901760
    %v315 = vsub.f32 %v177, %v314
    %v316 = vand.u32 %v315, 4294901760
    %v317 = vsub.f32 %v315, %v316
    %v318 = vand.u32 %v317, 4294901760
    %319 = vmatmul.f32.gmra.mxu0 %v318
    %v320 = vpop.f32.mrf.mxu0
    %v321 = vadd.f32 %v102, %v320
    %v322 = vand.u32 %v180, 4294901760
    %v323 = vsub.f32 %v180, %v322
    %v324 = vand.u32 %v323, 4294901760
    %v325 = vsub.f32 %v323, %v324
    %v326 = vand.u32 %v325, 4294901760
    %327 = vmatmul.f32.gmra.mxu0 %v326
    %v328 = vpop.f32.mrf.mxu0
    %v329 = vadd.f32 %v107, %v328
    %v330 = vand.u32 %v183, 4294901760
    %v331 = vsub.f32 %v183, %v330
    %v332 = vand.u32 %v331, 4294901760
    %v333 = vsub.f32 %v331, %v332
    %v334 = vand.u32 %v333, 4294901760
    %335 = vmatmul.f32.gmra.mxu0 %v334
    %v336 = vpop.f32.mrf.mxu0
    %v337 = vadd.f32 %v112, %v336
    %v338 = vand.u32 %v186, 4294901760
    %v339 = vsub.f32 %v186, %v338
    %v340 = vand.u32 %v339, 4294901760
    %v341 = vsub.f32 %v339, %v340
    %v342 = vand.u32 %v341, 4294901760
    %343 = vmatmul.f32.gmra.mxu0 %v342
    %v344 = vpop.f32.mrf.mxu0
    %v345 = vadd.f32 %v117, %v344
    %v346 = vand.u32 %v189, 4294901760
    %v347 = vsub.f32 %v189, %v346
    %v348 = vand.u32 %v347, 4294901760
    %v349 = vsub.f32 %v347, %v348
    %v350 = vand.u32 %v349, 4294901760
    %351 = vmatmul.f32.gmra.mxu0 %v350
    %v352 = vpop.f32.mrf.mxu0
    %v353 = vadd.f32 %v122, %v352
    %v354 = vand.u32 %v192, 4294901760
    %v355 = vsub.f32 %v192, %v354
    %v356 = vand.u32 %v355, 4294901760
    %v357 = vsub.f32 %v355, %v356
    %v358 = vand.u32 %v357, 4294901760
    %359 = vmatmul.f32.gmra.mxu0 %v358
    %v360 = vpop.f32.mrf.mxu0
    %v361 = vadd.f32 %v127, %v360
    %v362 = vand.u32 %v195, 4294901760
    %v363 = vsub.f32 %v195, %v362
    %v364 = vand.u32 %v363, 4294901760
    %v365 = vsub.f32 %v363, %v364
    %v366 = vand.u32 %v365, 4294901760
    %367 = vmatmul.f32.gmra.mxu0 %v366
    %v368 = vpop.f32.mrf.mxu0
    %v369 = vadd.f32 %v132, %v368
    %v370 = vand.u32 %v198, 4294901760
    %v371 = vsub.f32 %v198, %v370
    %v372 = vand.u32 %v371, 4294901760
    %v373 = vsub.f32 %v371, %v372
    %v374 = vand.u32 %v373, 4294901760
    %375 = vmatmul.f32.gmra.mxu0 %v374
    %v376 = vpop.f32.mrf.mxu0
    %v377 = vadd.f32 %v137, %v376
    %v378 = vand.u32 %v201, 4294901760
    %v379 = vsub.f32 %v201, %v378
    %v380 = vand.u32 %v379, 4294901760
    %v381 = vsub.f32 %v379, %v380
    %v382 = vand.u32 %v381, 4294901760
    %383 = vmatmul.f32.gmra.mxu0 %v382
    %v384 = vpop.f32.mrf.mxu0
    %v385 = vadd.f32 %v142, %v384
    %v386 = vand.u32 %v204, 4294901760
    %v387 = vsub.f32 %v204, %v386
    %v388 = vand.u32 %v387, 4294901760
    %v389 = vsub.f32 %v387, %v388
    %v390 = vand.u32 %v389, 4294901760
    %391 = vmatmul.f32.gmra.mxu0 %v390
    %v392 = vpop.f32.mrf.mxu0
    %v393 = vadd.f32 %v147, %v392
    %v394 = vand.u32 %v207, 4294901760
    %v395 = vsub.f32 %v207, %v394
    %v396 = vand.u32 %v395, 4294901760
    %v397 = vsub.f32 %v395, %v396
    %v398 = vand.u32 %v397, 4294901760
    %399 = vmatmul.f32.gmra.mxu0 %v398
    %v400 = vpop.f32.mrf.mxu0
    %v401 = vadd.f32 %v152, %v400
    %v402 = vand.u32 %v210, 4294901760
    %v403 = vsub.f32 %v210, %v402
    %v404 = vand.u32 %v403, 4294901760
    %v405 = vsub.f32 %v403, %v404
    %v406 = vand.u32 %v405, 4294901760
    %407 = vmatmul.f32.gmra.mxu0 %v406
    %v408 = vpop.f32.mrf.mxu0
    %v409 = vadd.f32 %v157, %v408
    %v410 = vand.u32 %v213, 4294901760
    %v411 = vsub.f32 %v213, %v410
    %v412 = vand.u32 %v411, 4294901760
    %v413 = vsub.f32 %v411, %v412
    %v414 = vand.u32 %v413, 4294901760
    %415 = vmatmul.f32.gmra.mxu0 %v414
    %v416 = vpop.f32.mrf.mxu0
    %v417 = vadd.f32 %v162, %v416
    %v418 = vand.u32 %v216, 4294901760
    %v419 = vsub.f32 %v216, %v418
    %v420 = vand.u32 %v419, 4294901760
    %v421 = vsub.f32 %v419, %v420
    %v422 = vand.u32 %v421, 4294901760
    %423 = vmatmul.f32.gmra.mxu0 %v422
    %v424 = vpop.f32.mrf.mxu0
    %v425 = vadd.f32 %v167, %v424
    %426 = vdwg.mxu0
    %v427 = vand.u32 %v264, 4294901760
    %v428 = vsub.f32 %v264, %v427
    %v429 = vand.u32 %v428, 4294901760
    %v430 = vsub.f32 %v428, %v429
    %v431 = vand.u32 %v430, 4294901760
    %432 = vmatpush.xpose.msra.mxu0 %v431
    %v433 = vand.u32 %v261, 4294901760
    %v434 = vsub.f32 %v261, %v433
    %v435 = vand.u32 %v434, 4294901760
    %v436 = vsub.f32 %v434, %v435
    %v437 = vand.u32 %v436, 4294901760
    %438 = vmatpush.xpose.msra.mxu0 %v437
    %v439 = vand.u32 %v258, 4294901760
    %v440 = vsub.f32 %v258, %v439
    %v441 = vand.u32 %v440, 4294901760
    %v442 = vsub.f32 %v440, %v441
    %v443 = vand.u32 %v442, 4294901760
    %444 = vmatpush.xpose.msra.mxu0 %v443
    %v445 = vand.u32 %v255, 4294901760
    %v446 = vsub.f32 %v255, %v445
    %v447 = vand.u32 %v446, 4294901760
    %v448 = vsub.f32 %v446, %v447
    %v449 = vand.u32 %v448, 4294901760
    %450 = vmatpush.xpose.msra.mxu0 %v449
    %v451 = vand.u32 %v252, 4294901760
    %v452 = vsub.f32 %v252, %v451
    %v453 = vand.u32 %v452, 4294901760
    %v454 = vsub.f32 %v452, %v453
    %v455 = vand.u32 %v454, 4294901760
    %456 = vmatpush.xpose.msra.mxu0 %v455
    %v457 = vand.u32 %v249, 4294901760
    %v458 = vsub.f32 %v249, %v457
    %v459 = vand.u32 %v458, 4294901760
    %v460 = vsub.f32 %v458, %v459
    %v461 = vand.u32 %v460, 4294901760
    %462 = vmatpush.xpose.msra.mxu0 %v461
    %v463 = vand.u32 %v246, 4294901760
    %v464 = vsub.f32 %v246, %v463
    %v465 = vand.u32 %v464, 4294901760
    %v466 = vsub.f32 %v464, %v465
    %v467 = vand.u32 %v466, 4294901760
    %468 = vmatpush.xpose.msra.mxu0 %v467
    %v469 = vand.u32 %v243, 4294901760
    %v470 = vsub.f32 %v243, %v469
    %v471 = vand.u32 %v470, 4294901760
    %v472 = vsub.f32 %v470, %v471
    %v473 = vand.u32 %v472, 4294901760
    %474 = vmatpush.xpose.msra.mxu0 %v473
    %v475 = vand.u32 %v240, 4294901760
    %v476 = vsub.f32 %v240, %v475
    %v477 = vand.u32 %v476, 4294901760
    %v478 = vsub.f32 %v476, %v477
    %v479 = vand.u32 %v478, 4294901760
    %480 = vmatpush.xpose.msra.mxu0 %v479
    %v481 = vand.u32 %v237, 4294901760
    %v482 = vsub.f32 %v237, %v481
    %v483 = vand.u32 %v482, 4294901760
    %v484 = vsub.f32 %v482, %v483
    %v485 = vand.u32 %v484, 4294901760
    %486 = vmatpush.xpose.msra.mxu0 %v485
    %v487 = vand.u32 %v234, 4294901760
    %v488 = vsub.f32 %v234, %v487
    %v489 = vand.u32 %v488, 4294901760
    %v490 = vsub.f32 %v488, %v489
    %v491 = vand.u32 %v490, 4294901760
    %492 = vmatpush.xpose.msra.mxu0 %v491
    %v493 = vand.u32 %v231, 4294901760
    %v494 = vsub.f32 %v231, %v493
    %v495 = vand.u32 %v494, 4294901760
    %v496 = vsub.f32 %v494, %v495
    %v497 = vand.u32 %v496, 4294901760
    %498 = vmatpush.xpose.msra.mxu0 %v497
    %v499 = vand.u32 %v228, 4294901760
    %v500 = vsub.f32 %v228, %v499
    %v501 = vand.u32 %v500, 4294901760
    %v502 = vsub.f32 %v500, %v501
    %v503 = vand.u32 %v502, 4294901760
    %504 = vmatpush.xpose.msra.mxu0 %v503
    %v505 = vand.u32 %v225, 4294901760
    %v506 = vsub.f32 %v225, %v505
    %v507 = vand.u32 %v506, 4294901760
    %v508 = vsub.f32 %v506, %v507
    %v509 = vand.u32 %v508, 4294901760
    %510 = vmatpush.xpose.msra.mxu0 %v509
    %v511 = vand.u32 %v222, 4294901760
    %v512 = vsub.f32 %v222, %v511
    %v513 = vand.u32 %v512, 4294901760
    %v514 = vsub.f32 %v512, %v513
    %v515 = vand.u32 %v514, 4294901760
    %516 = vmatpush.xpose.msra.mxu0 %v515
    %v517 = vand.u32 %v219, 4294901760
    %v518 = vsub.f32 %v219, %v517
    %v519 = vand.u32 %v518, 4294901760
    %v520 = vsub.f32 %v518, %v519
    %v521 = vand.u32 %v520, 4294901760
    %522 = vmatpush.xpose.msra.mxu0 %v521
    %v523 = vand.u32 %v171, 4294901760
    %524 = vmatmul.f32.gmra.mxu0 %v523
    %v525 = vpop.f32.mrf.mxu0
    %v526 = vadd.f32 %v305, %v525
    %v527 = vand.u32 %v174, 4294901760
    %528 = vmatmul.f32.gmra.mxu0 %v527
    %v529 = vpop.f32.mrf.mxu0
    %v530 = vadd.f32 %v313, %v529
    %v531 = vand.u32 %v177, 4294901760
    %532 = vmatmul.f32.gmra.mxu0 %v531
    %v533 = vpop.f32.mrf.mxu0
    %v534 = vadd.f32 %v321, %v533
    %v535 = vand.u32 %v180, 4294901760
    %536 = vmatmul.f32.gmra.mxu0 %v535
    %v537 = vpop.f32.mrf.mxu0
    %v538 = vadd.f32 %v329, %v537
    %v539 = vand.u32 %v183, 4294901760
    %540 = vmatmul.f32.gmra.mxu0 %v539
    %v541 = vpop.f32.mrf.mxu0
    %v542 = vadd.f32 %v337, %v541
    %v543 = vand.u32 %v186, 4294901760
    %544 = vmatmul.f32.gmra.mxu0 %v543
    %v545 = vpop.f32.mrf.mxu0
    %v546 = vadd.f32 %v345, %v545
    %v547 = vand.u32 %v189, 4294901760
    %548 = vmatmul.f32.gmra.mxu0 %v547
    %v549 = vpop.f32.mrf.mxu0
    %v550 = vadd.f32 %v353, %v549
    %v551 = vand.u32 %v192, 4294901760
    %552 = vmatmul.f32.gmra.mxu0 %v551
    %v553 = vpop.f32.mrf.mxu0
    %v554 = vadd.f32 %v361, %v553
    %v555 = vand.u32 %v195, 4294901760
    %556 = vmatmul.f32.gmra.mxu0 %v555
    %v557 = vpop.f32.mrf.mxu0
    %v558 = vadd.f32 %v369, %v557
    %v559 = vand.u32 %v198, 4294901760
    %560 = vmatmul.f32.gmra.mxu0 %v559
    %v561 = vpop.f32.mrf.mxu0
    %v562 = vadd.f32 %v377, %v561
    %v563 = vand.u32 %v201, 4294901760
    %564 = vmatmul.f32.gmra.mxu0 %v563
    %v565 = vpop.f32.mrf.mxu0
    %v566 = vadd.f32 %v385, %v565
    %v567 = vand.u32 %v204, 4294901760
    %568 = vmatmul.f32.gmra.mxu0 %v567
    %v569 = vpop.f32.mrf.mxu0
    %v570 = vadd.f32 %v393, %v569
    %v571 = vand.u32 %v207, 4294901760
    %572 = vmatmul.f32.gmra.mxu0 %v571
    %v573 = vpop.f32.mrf.mxu0
    %v574 = vadd.f32 %v401, %v573
    %v575 = vand.u32 %v210, 4294901760
    %576 = vmatmul.f32.gmra.mxu0 %v575
    %v577 = vpop.f32.mrf.mxu0
    %v578 = vadd.f32 %v409, %v577
    %v579 = vand.u32 %v213, 4294901760
    %580 = vmatmul.f32.gmra.mxu0 %v579
    %v581 = vpop.f32.mrf.mxu0
    %v582 = vadd.f32 %v417, %v581
    %v583 = vand.u32 %v216, 4294901760
    %584 = vmatmul.f32.gmra.mxu0 %v583
    %v585 = vpop.f32.mrf.mxu0
    %v586 = vadd.f32 %v425, %v585
    %587 = vdwg.mxu0
    %v588 = vand.u32 %v264, 4294901760
    %v589 = vsub.f32 %v264, %v588
    %590 = vmatpush.xpose.msra.mxu0 %v589
    %v591 = vand.u32 %v261, 4294901760
    %v592 = vsub.f32 %v261, %v591
    %593 = vmatpush.xpose.msra.mxu0 %v592
    %v594 = vand.u32 %v258, 4294901760
    %v595 = vsub.f32 %v258, %v594
    %596 = vmatpush.xpose.msra.mxu0 %v595
    %v597 = vand.u32 %v255, 4294901760
    %v598 = vsub.f32 %v255, %v597
    %599 = vmatpush.xpose.msra.mxu0 %v598
    %v600 = vand.u32 %v252, 4294901760
    %v601 = vsub.f32 %v252, %v600
    %602 = vmatpush.xpose.msra.mxu0 %v601
    %v603 = vand.u32 %v249, 4294901760
    %v604 = vsub.f32 %v249, %v603
    %605 = vmatpush.xpose.msra.mxu0 %v604
    %v606 = vand.u32 %v246, 4294901760
    %v607 = vsub.f32 %v246, %v606
    %608 = vmatpush.xpose.msra.mxu0 %v607
    %v609 = vand.u32 %v243, 4294901760
    %v610 = vsub.f32 %v243, %v609
    %611 = vmatpush.xpose.msra.mxu0 %v610
    %v612 = vand.u32 %v240, 4294901760
    %v613 = vsub.f32 %v240, %v612
    %614 = vmatpush.xpose.msra.mxu0 %v613
    %v615 = vand.u32 %v237, 4294901760
    %v616 = vsub.f32 %v237, %v615
    %617 = vmatpush.xpose.msra.mxu0 %v616
    %v618 = vand.u32 %v234, 4294901760
    %v619 = vsub.f32 %v234, %v618
    %620 = vmatpush.xpose.msra.mxu0 %v619
    %v621 = vand.u32 %v231, 4294901760
    %v622 = vsub.f32 %v231, %v621
    %623 = vmatpush.xpose.msra.mxu0 %v622
    %v624 = vand.u32 %v228, 4294901760
    %v625 = vsub.f32 %v228, %v624
    %626 = vmatpush.xpose.msra.mxu0 %v625
    %v627 = vand.u32 %v225, 4294901760
    %v628 = vsub.f32 %v225, %v627
    %629 = vmatpush.xpose.msra.mxu0 %v628
    %v630 = vand.u32 %v222, 4294901760
    %v631 = vsub.f32 %v222, %v630
    %632 = vmatpush.xpose.msra.mxu0 %v631
    %v633 = vand.u32 %v219, 4294901760
    %v634 = vsub.f32 %v219, %v633
    %635 = vmatpush.xpose.msra.mxu0 %v634
    %v636 = vand.u32 %v171, 4294901760
    %v637 = vsub.f32 %v171, %v636
    %638 = vmatmul.f32.gmra.mxu0 %v637
    %v639 = vpop.f32.mrf.mxu0
    %v640 = vadd.f32 %v526, %v639
    %v641 = vand.u32 %v174, 4294901760
    %v642 = vsub.f32 %v174, %v641
    %643 = vmatmul.f32.gmra.mxu0 %v642
    %v644 = vpop.f32.mrf.mxu0
    %v645 = vadd.f32 %v530, %v644
    %v646 = vand.u32 %v177, 4294901760
    %v647 = vsub.f32 %v177, %v646
    %648 = vmatmul.f32.gmra.mxu0 %v647
    %v649 = vpop.f32.mrf.mxu0
    %v650 = vadd.f32 %v534, %v649
    %v651 = vand.u32 %v180, 4294901760
    %v652 = vsub.f32 %v180, %v651
    %653 = vmatmul.f32.gmra.mxu0 %v652
    %v654 = vpop.f32.mrf.mxu0
    %v655 = vadd.f32 %v538, %v654
    %v656 = vand.u32 %v183, 4294901760
    %v657 = vsub.f32 %v183, %v656
    %658 = vmatmul.f32.gmra.mxu0 %v657
    %v659 = vpop.f32.mrf.mxu0
    %v660 = vadd.f32 %v542, %v659
    %v661 = vand.u32 %v186, 4294901760
    %v662 = vsub.f32 %v186, %v661
    %663 = vmatmul.f32.gmra.mxu0 %v662
    %v664 = vpop.f32.mrf.mxu0
    %v665 = vadd.f32 %v546, %v664
    %v666 = vand.u32 %v189, 4294901760
    %v667 = vsub.f32 %v189, %v666
    %668 = vmatmul.f32.gmra.mxu0 %v667
    %v669 = vpop.f32.mrf.mxu0
    %v670 = vadd.f32 %v550, %v669
    %v671 = vand.u32 %v192, 4294901760
    %v672 = vsub.f32 %v192, %v671
    %673 = vmatmul.f32.gmra.mxu0 %v672
    %v674 = vpop.f32.mrf.mxu0
    %v675 = vadd.f32 %v554, %v674
    %v676 = vand.u32 %v195, 4294901760
    %v677 = vsub.f32 %v195, %v676
    %678 = vmatmul.f32.gmra.mxu0 %v677
    %v679 = vpop.f32.mrf.mxu0
    %v680 = vadd.f32 %v558, %v679
    %v681 = vand.u32 %v198, 4294901760
    %v682 = vsub.f32 %v198, %v681
    %683 = vmatmul.f32.gmra.mxu0 %v682
    %v684 = vpop.f32.mrf.mxu0
    %v685 = vadd.f32 %v562, %v684
    %v686 = vand.u32 %v201, 4294901760
    %v687 = vsub.f32 %v201, %v686
    %688 = vmatmul.f32.gmra.mxu0 %v687
    %v689 = vpop.f32.mrf.mxu0
    %v690 = vadd.f32 %v566, %v689
    %v691 = vand.u32 %v204, 4294901760
    %v692 = vsub.f32 %v204, %v691
    %693 = vmatmul.f32.gmra.mxu0 %v692
    %v694 = vpop.f32.mrf.mxu0
    %v695 = vadd.f32 %v570, %v694
    %v696 = vand.u32 %v207, 4294901760
    %v697 = vsub.f32 %v207, %v696
    %698 = vmatmul.f32.gmra.mxu0 %v697
    %v699 = vpop.f32.mrf.mxu0
    %v700 = vadd.f32 %v574, %v699
    %v701 = vand.u32 %v210, 4294901760
    %v702 = vsub.f32 %v210, %v701
    %703 = vmatmul.f32.gmra.mxu0 %v702
    %v704 = vpop.f32.mrf.mxu0
    %v705 = vadd.f32 %v578, %v704
    %v706 = vand.u32 %v213, 4294901760
    %v707 = vsub.f32 %v213, %v706
    %708 = vmatmul.f32.gmra.mxu0 %v707
    %v709 = vpop.f32.mrf.mxu0
    %v710 = vadd.f32 %v582, %v709
    %v711 = vand.u32 %v216, 4294901760
    %v712 = vsub.f32 %v216, %v711
    %713 = vmatmul.f32.gmra.mxu0 %v712
    %v714 = vpop.f32.mrf.mxu0
    %v715 = vadd.f32 %v586, %v714
    %716 = vdwg.mxu0
    %v717 = vand.u32 %v264, 4294901760
    %718 = vmatpush.xpose.msra.mxu0 %v717
    %v719 = vand.u32 %v261, 4294901760
    %720 = vmatpush.xpose.msra.mxu0 %v719
    %v721 = vand.u32 %v258, 4294901760
    %722 = vmatpush.xpose.msra.mxu0 %v721
    %v723 = vand.u32 %v255, 4294901760
    %724 = vmatpush.xpose.msra.mxu0 %v723
    %v725 = vand.u32 %v252, 4294901760
    %726 = vmatpush.xpose.msra.mxu0 %v725
    %v727 = vand.u32 %v249, 4294901760
    %728 = vmatpush.xpose.msra.mxu0 %v727
    %v729 = vand.u32 %v246, 4294901760
    %730 = vmatpush.xpose.msra.mxu0 %v729
    %v731 = vand.u32 %v243, 4294901760
    %732 = vmatpush.xpose.msra.mxu0 %v731
    %v733 = vand.u32 %v240, 4294901760
    %734 = vmatpush.xpose.msra.mxu0 %v733
    %v735 = vand.u32 %v237, 4294901760
    %736 = vmatpush.xpose.msra.mxu0 %v735
    %v737 = vand.u32 %v234, 4294901760
    %738 = vmatpush.xpose.msra.mxu0 %v737
    %v739 = vand.u32 %v231, 4294901760
    %740 = vmatpush.xpose.msra.mxu0 %v739
    %v741 = vand.u32 %v228, 4294901760
    %742 = vmatpush.xpose.msra.mxu0 %v741
    %v743 = vand.u32 %v225, 4294901760
    %744 = vmatpush.xpose.msra.mxu0 %v743
    %v745 = vand.u32 %v222, 4294901760
    %746 = vmatpush.xpose.msra.mxu0 %v745
    %v747 = vand.u32 %v219, 4294901760
    %748 = vmatpush.xpose.msra.mxu0 %v747
    %v749 = vand.u32 %v171, 4294901760
    %v750 = vsub.f32 %v171, %v749
    %v751 = vand.u32 %v750, 4294901760
    %752 = vmatmul.f32.gmra.mxu0 %v751
    %v753 = vpop.f32.mrf.mxu0
    %v754 = vadd.f32 %v640, %v753
    %v755 = vand.u32 %v174, 4294901760
    %v756 = vsub.f32 %v174, %v755
    %v757 = vand.u32 %v756, 4294901760
    %758 = vmatmul.f32.gmra.mxu0 %v757
    %v759 = vpop.f32.mrf.mxu0
    %v760 = vadd.f32 %v645, %v759
    %v761 = vand.u32 %v177, 4294901760
    %v762 = vsub.f32 %v177, %v761
    %v763 = vand.u32 %v762, 4294901760
    %764 = vmatmul.f32.gmra.mxu0 %v763
    %v765 = vpop.f32.mrf.mxu0
    %v766 = vadd.f32 %v650, %v765
    %v767 = vand.u32 %v180, 4294901760
    %v768 = vsub.f32 %v180, %v767
    %v769 = vand.u32 %v768, 4294901760
    %770 = vmatmul.f32.gmra.mxu0 %v769
    %v771 = vpop.f32.mrf.mxu0
    %v772 = vadd.f32 %v655, %v771
    %v773 = vand.u32 %v183, 4294901760
    %v774 = vsub.f32 %v183, %v773
    %v775 = vand.u32 %v774, 4294901760
    %776 = vmatmul.f32.gmra.mxu0 %v775
    %v777 = vpop.f32.mrf.mxu0
    %v778 = vadd.f32 %v660, %v777
    %v779 = vand.u32 %v186, 4294901760
    %v780 = vsub.f32 %v186, %v779
    %v781 = vand.u32 %v780, 4294901760
    %782 = vmatmul.f32.gmra.mxu0 %v781
    %v783 = vpop.f32.mrf.mxu0
    %v784 = vadd.f32 %v665, %v783
    %v785 = vand.u32 %v189, 4294901760
    %v786 = vsub.f32 %v189, %v785
    %v787 = vand.u32 %v786, 4294901760
    %788 = vmatmul.f32.gmra.mxu0 %v787
    %v789 = vpop.f32.mrf.mxu0
    %v790 = vadd.f32 %v670, %v789
    %v791 = vand.u32 %v192, 4294901760
    %v792 = vsub.f32 %v192, %v791
    %v793 = vand.u32 %v792, 4294901760
    %794 = vmatmul.f32.gmra.mxu0 %v793
    %v795 = vpop.f32.mrf.mxu0
    %v796 = vadd.f32 %v675, %v795
    %v797 = vand.u32 %v195, 4294901760
    %v798 = vsub.f32 %v195, %v797
    %v799 = vand.u32 %v798, 4294901760
    %800 = vmatmul.f32.gmra.mxu0 %v799
    %v801 = vpop.f32.mrf.mxu0
    %v802 = vadd.f32 %v680, %v801
    %v803 = vand.u32 %v198, 4294901760
    %v804 = vsub.f32 %v198, %v803
    %v805 = vand.u32 %v804, 4294901760
    %806 = vmatmul.f32.gmra.mxu0 %v805
    %v807 = vpop.f32.mrf.mxu0
    %v808 = vadd.f32 %v685, %v807
    %v809 = vand.u32 %v201, 4294901760
    %v810 = vsub.f32 %v201, %v809
    %v811 = vand.u32 %v810, 4294901760
    %812 = vmatmul.f32.gmra.mxu0 %v811
    %v813 = vpop.f32.mrf.mxu0
    %v814 = vadd.f32 %v690, %v813
    %v815 = vand.u32 %v204, 4294901760
    %v816 = vsub.f32 %v204, %v815
    %v817 = vand.u32 %v816, 4294901760
    %818 = vmatmul.f32.gmra.mxu0 %v817
    %v819 = vpop.f32.mrf.mxu0
    %v820 = vadd.f32 %v695, %v819
    %v821 = vand.u32 %v207, 4294901760
    %v822 = vsub.f32 %v207, %v821
    %v823 = vand.u32 %v822, 4294901760
    %824 = vmatmul.f32.gmra.mxu0 %v823
    %v825 = vpop.f32.mrf.mxu0
    %v826 = vadd.f32 %v700, %v825
    %v827 = vand.u32 %v210, 4294901760
    %v828 = vsub.f32 %v210, %v827
    %v829 = vand.u32 %v828, 4294901760
    %830 = vmatmul.f32.gmra.mxu0 %v829
    %v831 = vpop.f32.mrf.mxu0
    %v832 = vadd.f32 %v705, %v831
    %v833 = vand.u32 %v213, 4294901760
    %v834 = vsub.f32 %v213, %v833
    %v835 = vand.u32 %v834, 4294901760
    %836 = vmatmul.f32.gmra.mxu0 %v835
    %v837 = vpop.f32.mrf.mxu0
    %v838 = vadd.f32 %v710, %v837
    %v839 = vand.u32 %v216, 4294901760
    %v840 = vsub.f32 %v216, %v839
    %v841 = vand.u32 %v840, 4294901760
    %842 = vmatmul.f32.gmra.mxu0 %v841
    %v843 = vpop.f32.mrf.mxu0
    %v844 = vadd.f32 %v715, %v843
    %845 = vdwg.mxu0
    %v846 = vand.u32 %v264, 4294901760
    %v847 = vsub.f32 %v264, %v846
    %v848 = vand.u32 %v847, 4294901760
    %849 = vmatpush.xpose.msra.mxu0 %v848
    %v850 = vand.u32 %v261, 4294901760
    %v851 = vsub.f32 %v261, %v850
    %v852 = vand.u32 %v851, 4294901760
    %853 = vmatpush.xpose.msra.mxu0 %v852
    %v854 = vand.u32 %v258, 4294901760
    %v855 = vsub.f32 %v258, %v854
    %v856 = vand.u32 %v855, 4294901760
    %857 = vmatpush.xpose.msra.mxu0 %v856
    %v858 = vand.u32 %v255, 4294901760
    %v859 = vsub.f32 %v255, %v858
    %v860 = vand.u32 %v859, 4294901760
    %861 = vmatpush.xpose.msra.mxu0 %v860
    %v862 = vand.u32 %v252, 4294901760
    %v863 = vsub.f32 %v252, %v862
    %v864 = vand.u32 %v863, 4294901760
    %865 = vmatpush.xpose.msra.mxu0 %v864
    %v866 = vand.u32 %v249, 4294901760
    %v867 = vsub.f32 %v249, %v866
    %v868 = vand.u32 %v867, 4294901760
    %869 = vmatpush.xpose.msra.mxu0 %v868
    %v870 = vand.u32 %v246, 4294901760
    %v871 = vsub.f32 %v246, %v870
    %v872 = vand.u32 %v871, 4294901760
    %873 = vmatpush.xpose.msra.mxu0 %v872
    %v874 = vand.u32 %v243, 4294901760
    %v875 = vsub.f32 %v243, %v874
    %v876 = vand.u32 %v875, 4294901760
    %877 = vmatpush.xpose.msra.mxu0 %v876
    %v878 = vand.u32 %v240, 4294901760
    %v879 = vsub.f32 %v240, %v878
    %v880 = vand.u32 %v879, 4294901760
    %881 = vmatpush.xpose.msra.mxu0 %v880
    %v882 = vand.u32 %v237, 4294901760
    %v883 = vsub.f32 %v237, %v882
    %v884 = vand.u32 %v883, 4294901760
    %885 = vmatpush.xpose.msra.mxu0 %v884
    %v886 = vand.u32 %v234, 4294901760
    %v887 = vsub.f32 %v234, %v886
    %v888 = vand.u32 %v887, 4294901760
    %889 = vmatpush.xpose.msra.mxu0 %v888
    %v890 = vand.u32 %v231, 4294901760
    %v891 = vsub.f32 %v231, %v890
    %v892 = vand.u32 %v891, 4294901760
    %893 = vmatpush.xpose.msra.mxu0 %v892
    %v894 = vand.u32 %v228, 4294901760
    %v895 = vsub.f32 %v228, %v894
    %v896 = vand.u32 %v895, 4294901760
    %897 = vmatpush.xpose.msra.mxu0 %v896
    %v898 = vand.u32 %v225, 4294901760
    %v899 = vsub.f32 %v225, %v898
    %v900 = vand.u32 %v899, 4294901760
    %901 = vmatpush.xpose.msra.mxu0 %v900
    %v902 = vand.u32 %v222, 4294901760
    %v903 = vsub.f32 %v222, %v902
    %v904 = vand.u32 %v903, 4294901760
    %905 = vmatpush.xpose.msra.mxu0 %v904
    %v906 = vand.u32 %v219, 4294901760
    %v907 = vsub.f32 %v219, %v906
    %v908 = vand.u32 %v907, 4294901760
    %909 = vmatpush.xpose.msra.mxu0 %v908
    %v910 = vand.u32 %v171, 4294901760
    %911 = vmatmul.f32.gmra.mxu0 %v910
    %v912 = vpop.f32.mrf.mxu0
    %v913 = vadd.f32 %v754, %v912
    %v914 = vand.u32 %v174, 4294901760
    %915 = vmatmul.f32.gmra.mxu0 %v914
    %v916 = vpop.f32.mrf.mxu0
    %v917 = vadd.f32 %v760, %v916
    %v918 = vand.u32 %v177, 4294901760
    %919 = vmatmul.f32.gmra.mxu0 %v918
    %v920 = vpop.f32.mrf.mxu0
    %v921 = vadd.f32 %v766, %v920
    %v922 = vand.u32 %v180, 4294901760
    %923 = vmatmul.f32.gmra.mxu0 %v922
    %v924 = vpop.f32.mrf.mxu0
    %v925 = vadd.f32 %v772, %v924
    %v926 = vand.u32 %v183, 4294901760
    %927 = vmatmul.f32.gmra.mxu0 %v926
    %v928 = vpop.f32.mrf.mxu0
    %v929 = vadd.f32 %v778, %v928
    %v930 = vand.u32 %v186, 4294901760
    %931 = vmatmul.f32.gmra.mxu0 %v930
    %v932 = vpop.f32.mrf.mxu0
    %v933 = vadd.f32 %v784, %v932
    %v934 = vand.u32 %v189, 4294901760
    %935 = vmatmul.f32.gmra.mxu0 %v934
    %v936 = vpop.f32.mrf.mxu0
    %v937 = vadd.f32 %v790, %v936
    %v938 = vand.u32 %v192, 4294901760
    %939 = vmatmul.f32.gmra.mxu0 %v938
    %v940 = vpop.f32.mrf.mxu0
    %v941 = vadd.f32 %v796, %v940
    %v942 = vand.u32 %v195, 4294901760
    %943 = vmatmul.f32.gmra.mxu0 %v942
    %v944 = vpop.f32.mrf.mxu0
    %v945 = vadd.f32 %v802, %v944
    %v946 = vand.u32 %v198, 4294901760
    %947 = vmatmul.f32.gmra.mxu0 %v946
    %v948 = vpop.f32.mrf.mxu0
    %v949 = vadd.f32 %v808, %v948
    %v950 = vand.u32 %v201, 4294901760
    %951 = vmatmul.f32.gmra.mxu0 %v950
    %v952 = vpop.f32.mrf.mxu0
    %v953 = vadd.f32 %v814, %v952
    %v954 = vand.u32 %v204, 4294901760
    %955 = vmatmul.f32.gmra.mxu0 %v954
    %v956 = vpop.f32.mrf.mxu0
    %v957 = vadd.f32 %v820, %v956
    %v958 = vand.u32 %v207, 4294901760
    %959 = vmatmul.f32.gmra.mxu0 %v958
    %v960 = vpop.f32.mrf.mxu0
    %v961 = vadd.f32 %v826, %v960
    %v962 = vand.u32 %v210, 4294901760
    %963 = vmatmul.f32.gmra.mxu0 %v962
    %v964 = vpop.f32.mrf.mxu0
    %v965 = vadd.f32 %v832, %v964
    %v966 = vand.u32 %v213, 4294901760
    %967 = vmatmul.f32.gmra.mxu0 %v966
    %v968 = vpop.f32.mrf.mxu0
    %v969 = vadd.f32 %v838, %v968
    %v970 = vand.u32 %v216, 4294901760
    %971 = vmatmul.f32.gmra.mxu0 %v970
    %v972 = vpop.f32.mrf.mxu0
    %v973 = vadd.f32 %v844, %v972
    %974 = vdwg.mxu0
    %v975 = vand.u32 %v264, 4294901760
    %976 = vmatpush.xpose.msra.mxu0 %v975
    %v977 = vand.u32 %v261, 4294901760
    %978 = vmatpush.xpose.msra.mxu0 %v977
    %v979 = vand.u32 %v258, 4294901760
    %980 = vmatpush.xpose.msra.mxu0 %v979
    %v981 = vand.u32 %v255, 4294901760
    %982 = vmatpush.xpose.msra.mxu0 %v981
    %v983 = vand.u32 %v252, 4294901760
    %984 = vmatpush.xpose.msra.mxu0 %v983
    %v985 = vand.u32 %v249, 4294901760
    %986 = vmatpush.xpose.msra.mxu0 %v985
    %v987 = vand.u32 %v246, 4294901760
    %988 = vmatpush.xpose.msra.mxu0 %v987
    %v989 = vand.u32 %v243, 4294901760
    %990 = vmatpush.xpose.msra.mxu0 %v989
    %v991 = vand.u32 %v240, 4294901760
    %992 = vmatpush.xpose.msra.mxu0 %v991
    %v993 = vand.u32 %v237, 4294901760
    %994 = vmatpush.xpose.msra.mxu0 %v993
    %v995 = vand.u32 %v234, 4294901760
    %996 = vmatpush.xpose.msra.mxu0 %v995
    %v997 = vand.u32 %v231, 4294901760
    %998 = vmatpush.xpose.msra.mxu0 %v997
    %v999 = vand.u32 %v228, 4294901760
    %1000 = vmatpush.xpose.msra.mxu0 %v999
    %v1001 = vand.u32 %v225, 4294901760
    %1002 = vmatpush.xpose.msra.mxu0 %v1001
    %v1003 = vand.u32 %v222, 4294901760
    %1004 = vmatpush.xpose.msra.mxu0 %v1003
    %v1005 = vand.u32 %v219, 4294901760
    %1006 = vmatpush.xpose.msra.mxu0 %v1005
    %v1007 = vand.u32 %v171, 4294901760
    %1008 = vmatmul.f32.gmra.mxu0 %v1007
    %v1009 = vpop.f32.mrf.mxu0
    %v1010 = vadd.f32 %v913, %v1009
    %v1011 = vand.u32 %v174, 4294901760
    %1012 = vmatmul.f32.gmra.mxu0 %v1011
    %v1013 = vpop.f32.mrf.mxu0
    %v1014 = vadd.f32 %v917, %v1013
    %v1015 = vand.u32 %v177, 4294901760
    %1016 = vmatmul.f32.gmra.mxu0 %v1015
    %v1017 = vpop.f32.mrf.mxu0
    %v1018 = vadd.f32 %v921, %v1017
    %v1019 = vand.u32 %v180, 4294901760
    %1020 = vmatmul.f32.gmra.mxu0 %v1019
    %v1021 = vpop.f32.mrf.mxu0
    %v1022 = vadd.f32 %v925, %v1021
    %v1023 = vand.u32 %v183, 4294901760
    %1024 = vmatmul.f32.gmra.mxu0 %v1023
    %v1025 = vpop.f32.mrf.mxu0
    %v1026 = vadd.f32 %v929, %v1025
    %v1027 = vand.u32 %v186, 4294901760
    %1028 = vmatmul.f32.gmra.mxu0 %v1027
    %v1029 = vpop.f32.mrf.mxu0
    %v1030 = vadd.f32 %v933, %v1029
    %v1031 = vand.u32 %v189, 4294901760
    %1032 = vmatmul.f32.gmra.mxu0 %v1031
    %v1033 = vpop.f32.mrf.mxu0
    %v1034 = vadd.f32 %v937, %v1033
    %v1035 = vand.u32 %v192, 4294901760
    %1036 = vmatmul.f32.gmra.mxu0 %v1035
    %v1037 = vpop.f32.mrf.mxu0
    %v1038 = vadd.f32 %v941, %v1037
    %v1039 = vand.u32 %v195, 4294901760
    %1040 = vmatmul.f32.gmra.mxu0 %v1039
    %v1041 = vpop.f32.mrf.mxu0
    %v1042 = vadd.f32 %v945, %v1041
    %v1043 = vand.u32 %v198, 4294901760
    %1044 = vmatmul.f32.gmra.mxu0 %v1043
    %v1045 = vpop.f32.mrf.mxu0
    %v1046 = vadd.f32 %v949, %v1045
    %v1047 = vand.u32 %v201, 4294901760
    %1048 = vmatmul.f32.gmra.mxu0 %v1047
    %v1049 = vpop.f32.mrf.mxu0
    %v1050 = vadd.f32 %v953, %v1049
    %v1051 = vand.u32 %v204, 4294901760
    %1052 = vmatmul.f32.gmra.mxu0 %v1051
    %v1053 = vpop.f32.mrf.mxu0
    %v1054 = vadd.f32 %v957, %v1053
    %v1055 = vand.u32 %v207, 4294901760
    %1056 = vmatmul.f32.gmra.mxu0 %v1055
    %v1057 = vpop.f32.mrf.mxu0
    %v1058 = vadd.f32 %v961, %v1057
    %v1059 = vand.u32 %v210, 4294901760
    %1060 = vmatmul.f32.gmra.mxu0 %v1059
    %v1061 = vpop.f32.mrf.mxu0
    %v1062 = vadd.f32 %v965, %v1061
    %v1063 = vand.u32 %v213, 4294901760
    %1064 = vmatmul.f32.gmra.mxu0 %v1063
    %v1065 = vpop.f32.mrf.mxu0
    %v1066 = vadd.f32 %v969, %v1065
    %v1067 = vand.u32 %v216, 4294901760
    %1068 = vmatmul.f32.gmra.mxu0 %v1067
    %v1069 = vpop.f32.mrf.mxu0
    %v1070 = vadd.f32 %v973, %v1069
    %1071 = vdwg.mxu0
    %v1072 = vmax.f32 %v1010, 0.0
    %v1073 = vmax.f32 %v1014, 0.0
    %v1074 = vmax.f32 %v1018, 0.0
    %v1075 = vmax.f32 %v1022, 0.0
    %v1076 = vmax.f32 %v1026, 0.0
    %v1077 = vmax.f32 %v1030, 0.0
    %v1078 = vmax.f32 %v1034, 0.0
    %v1079 = vmax.f32 %v1038, 0.0
    %v1080 = vmax.f32 %v1042, 0.0
    %v1081 = vmax.f32 %v1046, 0.0
    %v1082 = vmax.f32 %v1050, 0.0
    %v1083 = vmax.f32 %v1054, 0.0
    %v1084 = vmax.f32 %v1058, 0.0
    %v1085 = vmax.f32 %v1062, 0.0
    %v1086 = vmax.f32 %v1066, 0.0
    %v1087 = vmax.f32 %v1070, 0.0
    %v1088 = vld [vmem:[%s3] sm:$0xff]
    %v1089 = vld [vmem:[%s3 + $0x8] sm:$0xff]
    %v1090 = vld [vmem:[%s3 + $0x10] sm:$0xff]
    %v1091 = vld [vmem:[%s3 + $0x18] sm:$0xff]
    %v1092 = vld [vmem:[%s3 + $0x20] sm:$0xff]
    %v1093 = vld [vmem:[%s3 + $0x28] sm:$0xff]
    %v1094 = vld [vmem:[%s3 + $0x30] sm:$0xff]
    %v1095 = vld [vmem:[%s3 + $0x38] sm:$0xff]
    %v1096 = vld [vmem:[%s4] sm:$0xff]
    %v1097 = vld [vmem:[%s4 + $0x8] sm:$0xff]
    %v1098 = vld [vmem:[%s4 + $0x10] sm:$0xff]
    %v1099 = vld [vmem:[%s4 + $0x18] sm:$0xff]
    %v1100 = vld [vmem:[%s4 + $0x20] sm:$0xff]
    %v1101 = vld [vmem:[%s4 + $0x28] sm:$0xff]
    %v1102 = vld [vmem:[%s4 + $0x30] sm:$0xff]
    %v1103 = vld [vmem:[%s4 + $0x38] sm:$0xff]
    %1105 = vset.pattern.permute.xlu0 0
    %1106 = vperm.xlu0 %1105, %v1096
    %v1107 = vpop.permute.xlu0 %1106
    %1110 = vset.pattern.permute.xlu0 0
    %1111 = vperm.xlu0 %1110, %v1097
    %v1112 = vpop.permute.xlu0 %1111
    %1115 = vset.pattern.permute.xlu0 0
    %1116 = vperm.xlu0 %1115, %v1098
    %v1117 = vpop.permute.xlu0 %1116
    %1120 = vset.pattern.permute.xlu0 0
    %1121 = vperm.xlu0 %1120, %v1099
    %v1122 = vpop.permute.xlu0 %1121
    %1125 = vset.pattern.permute.xlu0 0
    %1126 = vperm.xlu0 %1125, %v1100
    %v1127 = vpop.permute.xlu0 %1126
    %1130 = vset.pattern.permute.xlu0 0
    %1131 = vperm.xlu0 %1130, %v1101
    %v1132 = vpop.permute.xlu0 %1131
    %1135 = vset.pattern.permute.xlu0 0
    %1136 = vperm.xlu0 %1135, %v1102
    %v1137 = vpop.permute.xlu0 %1136
    %1140 = vset.pattern.permute.xlu0 0
    %1141 = vperm.xlu0 %1140, %v1103
    %v1142 = vpop.permute.xlu0 %1141
    %v1144 = vand.u32 %v1087, 4294901760
    %1145 = vmatpush.msra.mxu0 %v1144
    %v1146 = vand.u32 %v1086, 4294901760
    %1147 = vmatpush.msra.mxu0 %v1146
    %v1148 = vand.u32 %v1085, 4294901760
    %1149 = vmatpush.msra.mxu0 %v1148
    %v1150 = vand.u32 %v1084, 4294901760
    %1151 = vmatpush.msra.mxu0 %v1150
    %v1152 = vand.u32 %v1083, 4294901760
    %1153 = vmatpush.msra.mxu0 %v1152
    %v1154 = vand.u32 %v1082, 4294901760
    %1155 = vmatpush.msra.mxu0 %v1154
    %v1156 = vand.u32 %v1081, 4294901760
    %1157 = vmatpush.msra.mxu0 %v1156
    %v1158 = vand.u32 %v1080, 4294901760
    %1159 = vmatpush.msra.mxu0 %v1158
    %v1160 = vand.u32 %v1079, 4294901760
    %1161 = vmatpush.msra.mxu0 %v1160
    %v1162 = vand.u32 %v1078, 4294901760
    %1163 = vmatpush.msra.mxu0 %v1162
    %v1164 = vand.u32 %v1077, 4294901760
    %1165 = vmatpush.msra.mxu0 %v1164
    %v1166 = vand.u32 %v1076, 4294901760
    %1167 = vmatpush.msra.mxu0 %v1166
    %v1168 = vand.u32 %v1075, 4294901760
    %1169 = vmatpush.msra.mxu0 %v1168
    %v1170 = vand.u32 %v1074, 4294901760
    %1171 = vmatpush.msra.mxu0 %v1170
    %v1172 = vand.u32 %v1073, 4294901760
    %1173 = vmatpush.msra.mxu0 %v1172
    %v1174 = vand.u32 %v1072, 4294901760
    %1175 = vmatpush.msra.mxu0 %v1174
    %v1176 = vand.u32 %v1088, 4294901760
    %v1177 = vsub.f32 %v1088, %v1176
    %v1178 = vand.u32 %v1177, 4294901760
    %v1179 = vsub.f32 %v1177, %v1178
    %v1180 = vand.u32 %v1179, 4294901760
    %1181 = vmatmul.f32.gmra.mxu0 %v1180
    %v1182 = vpop.f32.mrf.mxu0
    %v1183 = vadd.f32 %v1107, %v1182
    %v1184 = vand.u32 %v1089, 4294901760
    %v1185 = vsub.f32 %v1089, %v1184
    %v1186 = vand.u32 %v1185, 4294901760
    %v1187 = vsub.f32 %v1185, %v1186
    %v1188 = vand.u32 %v1187, 4294901760
    %1189 = vmatmul.f32.gmra.mxu0 %v1188
    %v1190 = vpop.f32.mrf.mxu0
    %v1191 = vadd.f32 %v1112, %v1190
    %v1192 = vand.u32 %v1090, 4294901760
    %v1193 = vsub.f32 %v1090, %v1192
    %v1194 = vand.u32 %v1193, 4294901760
    %v1195 = vsub.f32 %v1193, %v1194
    %v1196 = vand.u32 %v1195, 4294901760
    %1197 = vmatmul.f32.gmra.mxu0 %v1196
    %v1198 = vpop.f32.mrf.mxu0
    %v1199 = vadd.f32 %v1117, %v1198
    %v1200 = vand.u32 %v1091, 4294901760
    %v1201 = vsub.f32 %v1091, %v1200
    %v1202 = vand.u32 %v1201, 4294901760
    %v1203 = vsub.f32 %v1201, %v1202
    %v1204 = vand.u32 %v1203, 4294901760
    %1205 = vmatmul.f32.gmra.mxu0 %v1204
    %v1206 = vpop.f32.mrf.mxu0
    %v1207 = vadd.f32 %v1122, %v1206
    %v1208 = vand.u32 %v1092, 4294901760
    %v1209 = vsub.f32 %v1092, %v1208
    %v1210 = vand.u32 %v1209, 4294901760
    %v1211 = vsub.f32 %v1209, %v1210
    %v1212 = vand.u32 %v1211, 4294901760
    %1213 = vmatmul.f32.gmra.mxu0 %v1212
    %v1214 = vpop.f32.mrf.mxu0
    %v1215 = vadd.f32 %v1127, %v1214
    %v1216 = vand.u32 %v1093, 4294901760
    %v1217 = vsub.f32 %v1093, %v1216
    %v1218 = vand.u32 %v1217, 4294901760
    %v1219 = vsub.f32 %v1217, %v1218
    %v1220 = vand.u32 %v1219, 4294901760
    %1221 = vmatmul.f32.gmra.mxu0 %v1220
    %v1222 = vpop.f32.mrf.mxu0
    %v1223 = vadd.f32 %v1132, %v1222
    %v1224 = vand.u32 %v1094, 4294901760
    %v1225 = vsub.f32 %v1094, %v1224
    %v1226 = vand.u32 %v1225, 4294901760
    %v1227 = vsub.f32 %v1225, %v1226
    %v1228 = vand.u32 %v1227, 4294901760
    %1229 = vmatmul.f32.gmra.mxu0 %v1228
    %v1230 = vpop.f32.mrf.mxu0
    %v1231 = vadd.f32 %v1137, %v1230
    %v1232 = vand.u32 %v1095, 4294901760
    %v1233 = vsub.f32 %v1095, %v1232
    %v1234 = vand.u32 %v1233, 4294901760
    %v1235 = vsub.f32 %v1233, %v1234
    %v1236 = vand.u32 %v1235, 4294901760
    %1237 = vmatmul.f32.gmra.mxu0 %v1236
    %v1238 = vpop.f32.mrf.mxu0
    %v1239 = vadd.f32 %v1142, %v1238
    %1240 = vdwg.mxu0
    %v1241 = vand.u32 %v1087, 4294901760
    %v1242 = vsub.f32 %v1087, %v1241
    %v1243 = vand.u32 %v1242, 4294901760
    %v1244 = vsub.f32 %v1242, %v1243
    %v1245 = vand.u32 %v1244, 4294901760
    %1246 = vmatpush.msra.mxu0 %v1245
    %v1247 = vand.u32 %v1086, 4294901760
    %v1248 = vsub.f32 %v1086, %v1247
    %v1249 = vand.u32 %v1248, 4294901760
    %v1250 = vsub.f32 %v1248, %v1249
    %v1251 = vand.u32 %v1250, 4294901760
    %1252 = vmatpush.msra.mxu0 %v1251
    %v1253 = vand.u32 %v1085, 4294901760
    %v1254 = vsub.f32 %v1085, %v1253
    %v1255 = vand.u32 %v1254, 4294901760
    %v1256 = vsub.f32 %v1254, %v1255
    %v1257 = vand.u32 %v1256, 4294901760
    %1258 = vmatpush.msra.mxu0 %v1257
    %v1259 = vand.u32 %v1084, 4294901760
    %v1260 = vsub.f32 %v1084, %v1259
    %v1261 = vand.u32 %v1260, 4294901760
    %v1262 = vsub.f32 %v1260, %v1261
    %v1263 = vand.u32 %v1262, 4294901760
    %1264 = vmatpush.msra.mxu0 %v1263
    %v1265 = vand.u32 %v1083, 4294901760
    %v1266 = vsub.f32 %v1083, %v1265
    %v1267 = vand.u32 %v1266, 4294901760
    %v1268 = vsub.f32 %v1266, %v1267
    %v1269 = vand.u32 %v1268, 4294901760
    %1270 = vmatpush.msra.mxu0 %v1269
    %v1271 = vand.u32 %v1082, 4294901760
    %v1272 = vsub.f32 %v1082, %v1271
    %v1273 = vand.u32 %v1272, 4294901760
    %v1274 = vsub.f32 %v1272, %v1273
    %v1275 = vand.u32 %v1274, 4294901760
    %1276 = vmatpush.msra.mxu0 %v1275
    %v1277 = vand.u32 %v1081, 4294901760
    %v1278 = vsub.f32 %v1081, %v1277
    %v1279 = vand.u32 %v1278, 4294901760
    %v1280 = vsub.f32 %v1278, %v1279
    %v1281 = vand.u32 %v1280, 4294901760
    %1282 = vmatpush.msra.mxu0 %v1281
    %v1283 = vand.u32 %v1080, 4294901760
    %v1284 = vsub.f32 %v1080, %v1283
    %v1285 = vand.u32 %v1284, 4294901760
    %v1286 = vsub.f32 %v1284, %v1285
    %v1287 = vand.u32 %v1286, 4294901760
    %1288 = vmatpush.msra.mxu0 %v1287
    %v1289 = vand.u32 %v1079, 4294901760
    %v1290 = vsub.f32 %v1079, %v1289
    %v1291 = vand.u32 %v1290, 4294901760
    %v1292 = vsub.f32 %v1290, %v1291
    %v1293 = vand.u32 %v1292, 4294901760
    %1294 = vmatpush.msra.mxu0 %v1293
    %v1295 = vand.u32 %v1078, 4294901760
    %v1296 = vsub.f32 %v1078, %v1295
    %v1297 = vand.u32 %v1296, 4294901760
    %v1298 = vsub.f32 %v1296, %v1297
    %v1299 = vand.u32 %v1298, 4294901760
    %1300 = vmatpush.msra.mxu0 %v1299
    %v1301 = vand.u32 %v1077, 4294901760
    %v1302 = vsub.f32 %v1077, %v1301
    %v1303 = vand.u32 %v1302, 4294901760
    %v1304 = vsub.f32 %v1302, %v1303
    %v1305 = vand.u32 %v1304, 4294901760
    %1306 = vmatpush.msra.mxu0 %v1305
    %v1307 = vand.u32 %v1076, 4294901760
    %v1308 = vsub.f32 %v1076, %v1307
    %v1309 = vand.u32 %v1308, 4294901760
    %v1310 = vsub.f32 %v1308, %v1309
    %v1311 = vand.u32 %v1310, 4294901760
    %1312 = vmatpush.msra.mxu0 %v1311
    %v1313 = vand.u32 %v1075, 4294901760
    %v1314 = vsub.f32 %v1075, %v1313
    %v1315 = vand.u32 %v1314, 4294901760
    %v1316 = vsub.f32 %v1314, %v1315
    %v1317 = vand.u32 %v1316, 4294901760
    %1318 = vmatpush.msra.mxu0 %v1317
    %v1319 = vand.u32 %v1074, 4294901760
    %v1320 = vsub.f32 %v1074, %v1319
    %v1321 = vand.u32 %v1320, 4294901760
    %v1322 = vsub.f32 %v1320, %v1321
    %v1323 = vand.u32 %v1322, 4294901760
    %1324 = vmatpush.msra.mxu0 %v1323
    %v1325 = vand.u32 %v1073, 4294901760
    %v1326 = vsub.f32 %v1073, %v1325
    %v1327 = vand.u32 %v1326, 4294901760
    %v1328 = vsub.f32 %v1326, %v1327
    %v1329 = vand.u32 %v1328, 4294901760
    %1330 = vmatpush.msra.mxu0 %v1329
    %v1331 = vand.u32 %v1072, 4294901760
    %v1332 = vsub.f32 %v1072, %v1331
    %v1333 = vand.u32 %v1332, 4294901760
    %v1334 = vsub.f32 %v1332, %v1333
    %v1335 = vand.u32 %v1334, 4294901760
    %1336 = vmatpush.msra.mxu0 %v1335
    %v1337 = vand.u32 %v1088, 4294901760
    %1338 = vmatmul.f32.gmra.mxu0 %v1337
    %v1339 = vpop.f32.mrf.mxu0
    %v1340 = vadd.f32 %v1183, %v1339
    %v1341 = vand.u32 %v1089, 4294901760
    %1342 = vmatmul.f32.gmra.mxu0 %v1341
    %v1343 = vpop.f32.mrf.mxu0
    %v1344 = vadd.f32 %v1191, %v1343
    %v1345 = vand.u32 %v1090, 4294901760
    %1346 = vmatmul.f32.gmra.mxu0 %v1345
    %v1347 = vpop.f32.mrf.mxu0
    %v1348 = vadd.f32 %v1199, %v1347
    %v1349 = vand.u32 %v1091, 4294901760
    %1350 = vmatmul.f32.gmra.mxu0 %v1349
    %v1351 = vpop.f32.mrf.mxu0
    %v1352 = vadd.f32 %v1207, %v1351
    %v1353 = vand.u32 %v1092, 4294901760
    %1354 = vmatmul.f32.gmra.mxu0 %v1353
    %v1355 = vpop.f32.mrf.mxu0
    %v1356 = vadd.f32 %v1215, %v1355
    %v1357 = vand.u32 %v1093, 4294901760
    %1358 = vmatmul.f32.gmra.mxu0 %v1357
    %v1359 = vpop.f32.mrf.mxu0
    %v1360 = vadd.f32 %v1223, %v1359
    %v1361 = vand.u32 %v1094, 4294901760
    %1362 = vmatmul.f32.gmra.mxu0 %v1361
    %v1363 = vpop.f32.mrf.mxu0
    %v1364 = vadd.f32 %v1231, %v1363
    %v1365 = vand.u32 %v1095, 4294901760
    %1366 = vmatmul.f32.gmra.mxu0 %v1365
    %v1367 = vpop.f32.mrf.mxu0
    %v1368 = vadd.f32 %v1239, %v1367
    %1369 = vdwg.mxu0
    %v1370 = vand.u32 %v1087, 4294901760
    %v1371 = vsub.f32 %v1087, %v1370
    %1372 = vmatpush.msra.mxu0 %v1371
    %v1373 = vand.u32 %v1086, 4294901760
    %v1374 = vsub.f32 %v1086, %v1373
    %1375 = vmatpush.msra.mxu0 %v1374
    %v1376 = vand.u32 %v1085, 4294901760
    %v1377 = vsub.f32 %v1085, %v1376
    %1378 = vmatpush.msra.mxu0 %v1377
    %v1379 = vand.u32 %v1084, 4294901760
    %v1380 = vsub.f32 %v1084, %v1379
    %1381 = vmatpush.msra.mxu0 %v1380
    %v1382 = vand.u32 %v1083, 4294901760
    %v1383 = vsub.f32 %v1083, %v1382
    %1384 = vmatpush.msra.mxu0 %v1383
    %v1385 = vand.u32 %v1082, 4294901760
    %v1386 = vsub.f32 %v1082, %v1385
    %1387 = vmatpush.msra.mxu0 %v1386
    %v1388 = vand.u32 %v1081, 4294901760
    %v1389 = vsub.f32 %v1081, %v1388
    %1390 = vmatpush.msra.mxu0 %v1389
    %v1391 = vand.u32 %v1080, 4294901760
    %v1392 = vsub.f32 %v1080, %v1391
    %1393 = vmatpush.msra.mxu0 %v1392
    %v1394 = vand.u32 %v1079, 4294901760
    %v1395 = vsub.f32 %v1079, %v1394
    %1396 = vmatpush.msra.mxu0 %v1395
    %v1397 = vand.u32 %v1078, 4294901760
    %v1398 = vsub.f32 %v1078, %v1397
    %1399 = vmatpush.msra.mxu0 %v1398
    %v1400 = vand.u32 %v1077, 4294901760
    %v1401 = vsub.f32 %v1077, %v1400
    %1402 = vmatpush.msra.mxu0 %v1401
    %v1403 = vand.u32 %v1076, 4294901760
    %v1404 = vsub.f32 %v1076, %v1403
    %1405 = vmatpush.msra.mxu0 %v1404
    %v1406 = vand.u32 %v1075, 4294901760
    %v1407 = vsub.f32 %v1075, %v1406
    %1408 = vmatpush.msra.mxu0 %v1407
    %v1409 = vand.u32 %v1074, 4294901760
    %v1410 = vsub.f32 %v1074, %v1409
    %1411 = vmatpush.msra.mxu0 %v1410
    %v1412 = vand.u32 %v1073, 4294901760
    %v1413 = vsub.f32 %v1073, %v1412
    %1414 = vmatpush.msra.mxu0 %v1413
    %v1415 = vand.u32 %v1072, 4294901760
    %v1416 = vsub.f32 %v1072, %v1415
    %1417 = vmatpush.msra.mxu0 %v1416
    %v1418 = vand.u32 %v1088, 4294901760
    %v1419 = vsub.f32 %v1088, %v1418
    %1420 = vmatmul.f32.gmra.mxu0 %v1419
    %v1421 = vpop.f32.mrf.mxu0
    %v1422 = vadd.f32 %v1340, %v1421
    %v1423 = vand.u32 %v1089, 4294901760
    %v1424 = vsub.f32 %v1089, %v1423
    %1425 = vmatmul.f32.gmra.mxu0 %v1424
    %v1426 = vpop.f32.mrf.mxu0
    %v1427 = vadd.f32 %v1344, %v1426
    %v1428 = vand.u32 %v1090, 4294901760
    %v1429 = vsub.f32 %v1090, %v1428
    %1430 = vmatmul.f32.gmra.mxu0 %v1429
    %v1431 = vpop.f32.mrf.mxu0
    %v1432 = vadd.f32 %v1348, %v1431
    %v1433 = vand.u32 %v1091, 4294901760
    %v1434 = vsub.f32 %v1091, %v1433
    %1435 = vmatmul.f32.gmra.mxu0 %v1434
    %v1436 = vpop.f32.mrf.mxu0
    %v1437 = vadd.f32 %v1352, %v1436
    %v1438 = vand.u32 %v1092, 4294901760
    %v1439 = vsub.f32 %v1092, %v1438
    %1440 = vmatmul.f32.gmra.mxu0 %v1439
    %v1441 = vpop.f32.mrf.mxu0
    %v1442 = vadd.f32 %v1356, %v1441
    %v1443 = vand.u32 %v1093, 4294901760
    %v1444 = vsub.f32 %v1093, %v1443
    %1445 = vmatmul.f32.gmra.mxu0 %v1444
    %v1446 = vpop.f32.mrf.mxu0
    %v1447 = vadd.f32 %v1360, %v1446
    %v1448 = vand.u32 %v1094, 4294901760
    %v1449 = vsub.f32 %v1094, %v1448
    %1450 = vmatmul.f32.gmra.mxu0 %v1449
    %v1451 = vpop.f32.mrf.mxu0
    %v1452 = vadd.f32 %v1364, %v1451
    %v1453 = vand.u32 %v1095, 4294901760
    %v1454 = vsub.f32 %v1095, %v1453
    %1455 = vmatmul.f32.gmra.mxu0 %v1454
    %v1456 = vpop.f32.mrf.mxu0
    %v1457 = vadd.f32 %v1368, %v1456
    %1458 = vdwg.mxu0
    %v1459 = vand.u32 %v1087, 4294901760
    %1460 = vmatpush.msra.mxu0 %v1459
    %v1461 = vand.u32 %v1086, 4294901760
    %1462 = vmatpush.msra.mxu0 %v1461
    %v1463 = vand.u32 %v1085, 4294901760
    %1464 = vmatpush.msra.mxu0 %v1463
    %v1465 = vand.u32 %v1084, 4294901760
    %1466 = vmatpush.msra.mxu0 %v1465
    %v1467 = vand.u32 %v1083, 4294901760
    %1468 = vmatpush.msra.mxu0 %v1467
    %v1469 = vand.u32 %v1082, 4294901760
    %1470 = vmatpush.msra.mxu0 %v1469
    %v1471 = vand.u32 %v1081, 4294901760
    %1472 = vmatpush.msra.mxu0 %v1471
    %v1473 = vand.u32 %v1080, 4294901760
    %1474 = vmatpush.msra.mxu0 %v1473
    %v1475 = vand.u32 %v1079, 4294901760
    %1476 = vmatpush.msra.mxu0 %v1475
    %v1477 = vand.u32 %v1078, 4294901760
    %1478 = vmatpush.msra.mxu0 %v1477
    %v1479 = vand.u32 %v1077, 4294901760
    %1480 = vmatpush.msra.mxu0 %v1479
    %v1481 = vand.u32 %v1076, 4294901760
    %1482 = vmatpush.msra.mxu0 %v1481
    %v1483 = vand.u32 %v1075, 4294901760
    %1484 = vmatpush.msra.mxu0 %v1483
    %v1485 = vand.u32 %v1074, 4294901760
    %1486 = vmatpush.msra.mxu0 %v1485
    %v1487 = vand.u32 %v1073, 4294901760
    %1488 = vmatpush.msra.mxu0 %v1487
    %v1489 = vand.u32 %v1072, 4294901760
    %1490 = vmatpush.msra.mxu0 %v1489
    %v1491 = vand.u32 %v1088, 4294901760
    %v1492 = vsub.f32 %v1088, %v1491
    %v1493 = vand.u32 %v1492, 4294901760
    %1494 = vmatmul.f32.gmra.mxu0 %v1493
    %v1495 = vpop.f32.mrf.mxu0
    %v1496 = vadd.f32 %v1422, %v1495
    %v1497 = vand.u32 %v1089, 4294901760
    %v1498 = vsub.f32 %v1089, %v1497
    %v1499 = vand.u32 %v1498, 4294901760
    %1500 = vmatmul.f32.gmra.mxu0 %v1499
    %v1501 = vpop.f32.mrf.mxu0
    %v1502 = vadd.f32 %v1427, %v1501
    %v1503 = vand.u32 %v1090, 4294901760
    %v1504 = vsub.f32 %v1090, %v1503
    %v1505 = vand.u32 %v1504, 4294901760
    %1506 = vmatmul.f32.gmra.mxu0 %v1505
    %v1507 = vpop.f32.mrf.mxu0
    %v1508 = vadd.f32 %v1432, %v1507
    %v1509 = vand.u32 %v1091, 4294901760
    %v1510 = vsub.f32 %v1091, %v1509
    %v1511 = vand.u32 %v1510, 4294901760
    %1512 = vmatmul.f32.gmra.mxu0 %v1511
    %v1513 = vpop.f32.mrf.mxu0
    %v1514 = vadd.f32 %v1437, %v1513
    %v1515 = vand.u32 %v1092, 4294901760
    %v1516 = vsub.f32 %v1092, %v1515
    %v1517 = vand.u32 %v1516, 4294901760
    %1518 = vmatmul.f32.gmra.mxu0 %v1517
    %v1519 = vpop.f32.mrf.mxu0
    %v1520 = vadd.f32 %v1442, %v1519
    %v1521 = vand.u32 %v1093, 4294901760
    %v1522 = vsub.f32 %v1093, %v1521
    %v1523 = vand.u32 %v1522, 4294901760
    %1524 = vmatmul.f32.gmra.mxu0 %v1523
    %v1525 = vpop.f32.mrf.mxu0
    %v1526 = vadd.f32 %v1447, %v1525
    %v1527 = vand.u32 %v1094, 4294901760
    %v1528 = vsub.f32 %v1094, %v1527
    %v1529 = vand.u32 %v1528, 4294901760
    %1530 = vmatmul.f32.gmra.mxu0 %v1529
    %v1531 = vpop.f32.mrf.mxu0
    %v1532 = vadd.f32 %v1452, %v1531
    %v1533 = vand.u32 %v1095, 4294901760
    %v1534 = vsub.f32 %v1095, %v1533
    %v1535 = vand.u32 %v1534, 4294901760
    %1536 = vmatmul.f32.gmra.mxu0 %v1535
    %v1537 = vpop.f32.mrf.mxu0
    %v1538 = vadd.f32 %v1457, %v1537
    %1539 = vdwg.mxu0
    %v1540 = vand.u32 %v1087, 4294901760
    %v1541 = vsub.f32 %v1087, %v1540
    %v1542 = vand.u32 %v1541, 4294901760
    %1543 = vmatpush.msra.mxu0 %v1542
    %v1544 = vand.u32 %v1086, 4294901760
    %v1545 = vsub.f32 %v1086, %v1544
    %v1546 = vand.u32 %v1545, 4294901760
    %1547 = vmatpush.msra.mxu0 %v1546
    %v1548 = vand.u32 %v1085, 4294901760
    %v1549 = vsub.f32 %v1085, %v1548
    %v1550 = vand.u32 %v1549, 4294901760
    %1551 = vmatpush.msra.mxu0 %v1550
    %v1552 = vand.u32 %v1084, 4294901760
    %v1553 = vsub.f32 %v1084, %v1552
    %v1554 = vand.u32 %v1553, 4294901760
    %1555 = vmatpush.msra.mxu0 %v1554
    %v1556 = vand.u32 %v1083, 4294901760
    %v1557 = vsub.f32 %v1083, %v1556
    %v1558 = vand.u32 %v1557, 4294901760
    %1559 = vmatpush.msra.mxu0 %v1558
    %v1560 = vand.u32 %v1082, 4294901760
    %v1561 = vsub.f32 %v1082, %v1560
    %v1562 = vand.u32 %v1561, 4294901760
    %1563 = vmatpush.msra.mxu0 %v1562
    %v1564 = vand.u32 %v1081, 4294901760
    %v1565 = vsub.f32 %v1081, %v1564
    %v1566 = vand.u32 %v1565, 4294901760
    %1567 = vmatpush.msra.mxu0 %v1566
    %v1568 = vand.u32 %v1080, 4294901760
    %v1569 = vsub.f32 %v1080, %v1568
    %v1570 = vand.u32 %v1569, 4294901760
    %1571 = vmatpush.msra.mxu0 %v1570
    %v1572 = vand.u32 %v1079, 4294901760
    %v1573 = vsub.f32 %v1079, %v1572
    %v1574 = vand.u32 %v1573, 4294901760
    %1575 = vmatpush.msra.mxu0 %v1574
    %v1576 = vand.u32 %v1078, 4294901760
    %v1577 = vsub.f32 %v1078, %v1576
    %v1578 = vand.u32 %v1577, 4294901760
    %1579 = vmatpush.msra.mxu0 %v1578
    %v1580 = vand.u32 %v1077, 4294901760
    %v1581 = vsub.f32 %v1077, %v1580
    %v1582 = vand.u32 %v1581, 4294901760
    %1583 = vmatpush.msra.mxu0 %v1582
    %v1584 = vand.u32 %v1076, 4294901760
    %v1585 = vsub.f32 %v1076, %v1584
    %v1586 = vand.u32 %v1585, 4294901760
    %1587 = vmatpush.msra.mxu0 %v1586
    %v1588 = vand.u32 %v1075, 4294901760
    %v1589 = vsub.f32 %v1075, %v1588
    %v1590 = vand.u32 %v1589, 4294901760
    %1591 = vmatpush.msra.mxu0 %v1590
    %v1592 = vand.u32 %v1074, 4294901760
    %v1593 = vsub.f32 %v1074, %v1592
    %v1594 = vand.u32 %v1593, 4294901760
    %1595 = vmatpush.msra.mxu0 %v1594
    %v1596 = vand.u32 %v1073, 4294901760
    %v1597 = vsub.f32 %v1073, %v1596
    %v1598 = vand.u32 %v1597, 4294901760
    %1599 = vmatpush.msra.mxu0 %v1598
    %v1600 = vand.u32 %v1072, 4294901760
    %v1601 = vsub.f32 %v1072, %v1600
    %v1602 = vand.u32 %v1601, 4294901760
    %1603 = vmatpush.msra.mxu0 %v1602
    %v1604 = vand.u32 %v1088, 4294901760
    %1605 = vmatmul.f32.gmra.mxu0 %v1604
    %v1606 = vpop.f32.mrf.mxu0
    %v1607 = vadd.f32 %v1496, %v1606
    %v1608 = vand.u32 %v1089, 4294901760
    %1609 = vmatmul.f32.gmra.mxu0 %v1608
    %v1610 = vpop.f32.mrf.mxu0
    %v1611 = vadd.f32 %v1502, %v1610
    %v1612 = vand.u32 %v1090, 4294901760
    %1613 = vmatmul.f32.gmra.mxu0 %v1612
    %v1614 = vpop.f32.mrf.mxu0
    %v1615 = vadd.f32 %v1508, %v1614
    %v1616 = vand.u32 %v1091, 4294901760
    %1617 = vmatmul.f32.gmra.mxu0 %v1616
    %v1618 = vpop.f32.mrf.mxu0
    %v1619 = vadd.f32 %v1514, %v1618
    %v1620 = vand.u32 %v1092, 4294901760
    %1621 = vmatmul.f32.gmra.mxu0 %v1620
    %v1622 = vpop.f32.mrf.mxu0
    %v1623 = vadd.f32 %v1520, %v1622
    %v1624 = vand.u32 %v1093, 4294901760
    %1625 = vmatmul.f32.gmra.mxu0 %v1624
    %v1626 = vpop.f32.mrf.mxu0
    %v1627 = vadd.f32 %v1526, %v1626
    %v1628 = vand.u32 %v1094, 4294901760
    %1629 = vmatmul.f32.gmra.mxu0 %v1628
    %v1630 = vpop.f32.mrf.mxu0
    %v1631 = vadd.f32 %v1532, %v1630
    %v1632 = vand.u32 %v1095, 4294901760
    %1633 = vmatmul.f32.gmra.mxu0 %v1632
    %v1634 = vpop.f32.mrf.mxu0
    %v1635 = vadd.f32 %v1538, %v1634
    %1636 = vdwg.mxu0
    %v1637 = vand.u32 %v1087, 4294901760
    %1638 = vmatpush.msra.mxu0 %v1637
    %v1639 = vand.u32 %v1086, 4294901760
    %1640 = vmatpush.msra.mxu0 %v1639
    %v1641 = vand.u32 %v1085, 4294901760
    %1642 = vmatpush.msra.mxu0 %v1641
    %v1643 = vand.u32 %v1084, 4294901760
    %1644 = vmatpush.msra.mxu0 %v1643
    %v1645 = vand.u32 %v1083, 4294901760
    %1646 = vmatpush.msra.mxu0 %v1645
    %v1647 = vand.u32 %v1082, 4294901760
    %1648 = vmatpush.msra.mxu0 %v1647
    %v1649 = vand.u32 %v1081, 4294901760
    %1650 = vmatpush.msra.mxu0 %v1649
    %v1651 = vand.u32 %v1080, 4294901760
    %1652 = vmatpush.msra.mxu0 %v1651
    %v1653 = vand.u32 %v1079, 4294901760
    %1654 = vmatpush.msra.mxu0 %v1653
    %v1655 = vand.u32 %v1078, 4294901760
    %1656 = vmatpush.msra.mxu0 %v1655
    %v1657 = vand.u32 %v1077, 4294901760
    %1658 = vmatpush.msra.mxu0 %v1657
    %v1659 = vand.u32 %v1076, 4294901760
    %1660 = vmatpush.msra.mxu0 %v1659
    %v1661 = vand.u32 %v1075, 4294901760
    %1662 = vmatpush.msra.mxu0 %v1661
    %v1663 = vand.u32 %v1074, 4294901760
    %1664 = vmatpush.msra.mxu0 %v1663
    %v1665 = vand.u32 %v1073, 4294901760
    %1666 = vmatpush.msra.mxu0 %v1665
    %v1667 = vand.u32 %v1072, 4294901760
    %1668 = vmatpush.msra.mxu0 %v1667
    %v1669 = vand.u32 %v1088, 4294901760
    %1670 = vmatmul.f32.gmra.mxu0 %v1669
    %v1671 = vpop.f32.mrf.mxu0
    %v1672 = vadd.f32 %v1607, %v1671
    %v1673 = vand.u32 %v1089, 4294901760
    %1674 = vmatmul.f32.gmra.mxu0 %v1673
    %v1675 = vpop.f32.mrf.mxu0
    %v1676 = vadd.f32 %v1611, %v1675
    %v1677 = vand.u32 %v1090, 4294901760
    %1678 = vmatmul.f32.gmra.mxu0 %v1677
    %v1679 = vpop.f32.mrf.mxu0
    %v1680 = vadd.f32 %v1615, %v1679
    %v1681 = vand.u32 %v1091, 4294901760
    %1682 = vmatmul.f32.gmra.mxu0 %v1681
    %v1683 = vpop.f32.mrf.mxu0
    %v1684 = vadd.f32 %v1619, %v1683
    %v1685 = vand.u32 %v1092, 4294901760
    %1686 = vmatmul.f32.gmra.mxu0 %v1685
    %v1687 = vpop.f32.mrf.mxu0
    %v1688 = vadd.f32 %v1623, %v1687
    %v1689 = vand.u32 %v1093, 4294901760
    %1690 = vmatmul.f32.gmra.mxu0 %v1689
    %v1691 = vpop.f32.mrf.mxu0
    %v1692 = vadd.f32 %v1627, %v1691
    %v1693 = vand.u32 %v1094, 4294901760
    %1694 = vmatmul.f32.gmra.mxu0 %v1693
    %v1695 = vpop.f32.mrf.mxu0
    %v1696 = vadd.f32 %v1631, %v1695
    %v1697 = vand.u32 %v1095, 4294901760
    %1698 = vmatmul.f32.gmra.mxu0 %v1697
    %v1699 = vpop.f32.mrf.mxu0
    %v1700 = vadd.f32 %v1635, %v1699
    %1701 = vdwg.mxu0
    %v1702 = vmax.f32 %v1672, 0.0
    %v1703 = vmax.f32 %v1676, 0.0
    %v1704 = vmax.f32 %v1680, 0.0
    %v1705 = vmax.f32 %v1684, 0.0
    %v1706 = vmax.f32 %v1688, 0.0
    %v1707 = vmax.f32 %v1692, 0.0
    %v1708 = vmax.f32 %v1696, 0.0
    %v1709 = vmax.f32 %v1700, 0.0
    %v1710 = vld [vmem:[%s5] sm:$0xff]
    %v1711 = vld [vmem:[%s5 + $0x8] sm:$0xff]
    %v1712 = vld [vmem:[%s5 + $0x10] sm:$0xff]
    %v1713 = vld [vmem:[%s5 + $0x18] sm:$0xff]
    %v1714 = vld [vmem:[%s6] sm:$0xff]
    %v1715 = vld [vmem:[%s6 + $0x8] sm:$0xff]
    %v1716 = vld [vmem:[%s6 + $0x10] sm:$0xff]
    %v1717 = vld [vmem:[%s6 + $0x18] sm:$0xff]
    %1719 = vset.pattern.permute.xlu0 0
    %1720 = vperm.xlu0 %1719, %v1714
    %v1721 = vpop.permute.xlu0 %1720
    %1724 = vset.pattern.permute.xlu0 0
    %1725 = vperm.xlu0 %1724, %v1715
    %v1726 = vpop.permute.xlu0 %1725
    %1729 = vset.pattern.permute.xlu0 0
    %1730 = vperm.xlu0 %1729, %v1716
    %v1731 = vpop.permute.xlu0 %1730
    %1734 = vset.pattern.permute.xlu0 0
    %1735 = vperm.xlu0 %1734, %v1717
    %v1736 = vpop.permute.xlu0 %1735
    %vm1738 = vcmask 523264
    %v1740 = vsel %vm1738, %v1710, 0
    %v1743 = vsel %vm1738, %v1711, 0
    %v1746 = vsel %vm1738, %v1712, 0
    %v1749 = vsel %vm1738, %v1713, 0
    %1751 = vmatpush.msra.mxu0 0.0
    %1752 = vmatpush.msra.mxu0 0.0
    %1753 = vmatpush.msra.mxu0 0.0
    %1754 = vmatpush.msra.mxu0 0.0
    %1755 = vmatpush.msra.mxu0 0.0
    %1756 = vmatpush.msra.mxu0 0.0
    %1757 = vmatpush.msra.mxu0 0.0
    %1758 = vmatpush.msra.mxu0 0.0
    %v1759 = vand.u32 %v1709, 4294901760
    %1760 = vmatpush.msra.mxu0 %v1759
    %v1761 = vand.u32 %v1708, 4294901760
    %1762 = vmatpush.msra.mxu0 %v1761
    %v1763 = vand.u32 %v1707, 4294901760
    %1764 = vmatpush.msra.mxu0 %v1763
    %v1765 = vand.u32 %v1706, 4294901760
    %1766 = vmatpush.msra.mxu0 %v1765
    %v1767 = vand.u32 %v1705, 4294901760
    %1768 = vmatpush.msra.mxu0 %v1767
    %v1769 = vand.u32 %v1704, 4294901760
    %1770 = vmatpush.msra.mxu0 %v1769
    %v1771 = vand.u32 %v1703, 4294901760
    %1772 = vmatpush.msra.mxu0 %v1771
    %v1773 = vand.u32 %v1702, 4294901760
    %1774 = vmatpush.msra.mxu0 %v1773
    %v1775 = vand.u32 %v1740, 4294901760
    %v1776 = vsub.f32 %v1740, %v1775
    %v1777 = vand.u32 %v1776, 4294901760
    %v1778 = vsub.f32 %v1776, %v1777
    %v1779 = vand.u32 %v1778, 4294901760
    %1780 = vmatmul.f32.gmra.mxu0 %v1779
    %v1781 = vpop.f32.mrf.mxu0
    %v1782 = vadd.f32 %v1721, %v1781
    %v1783 = vand.u32 %v1743, 4294901760
    %v1784 = vsub.f32 %v1743, %v1783
    %v1785 = vand.u32 %v1784, 4294901760
    %v1786 = vsub.f32 %v1784, %v1785
    %v1787 = vand.u32 %v1786, 4294901760
    %1788 = vmatmul.f32.gmra.mxu0 %v1787
    %v1789 = vpop.f32.mrf.mxu0
    %v1790 = vadd.f32 %v1726, %v1789
    %v1791 = vand.u32 %v1746, 4294901760
    %v1792 = vsub.f32 %v1746, %v1791
    %v1793 = vand.u32 %v1792, 4294901760
    %v1794 = vsub.f32 %v1792, %v1793
    %v1795 = vand.u32 %v1794, 4294901760
    %1796 = vmatmul.f32.gmra.mxu0 %v1795
    %v1797 = vpop.f32.mrf.mxu0
    %v1798 = vadd.f32 %v1731, %v1797
    %v1799 = vand.u32 %v1749, 4294901760
    %v1800 = vsub.f32 %v1749, %v1799
    %v1801 = vand.u32 %v1800, 4294901760
    %v1802 = vsub.f32 %v1800, %v1801
    %v1803 = vand.u32 %v1802, 4294901760
    %1804 = vmatmul.f32.gmra.mxu0 %v1803
    %v1805 = vpop.f32.mrf.mxu0
    %v1806 = vadd.f32 %v1736, %v1805
    %1807 = vdwg.mxu0
    %1808 = vmatpush.msra.mxu0 0.0
    %1809 = vmatpush.msra.mxu0 0.0
    %1810 = vmatpush.msra.mxu0 0.0
    %1811 = vmatpush.msra.mxu0 0.0
    %1812 = vmatpush.msra.mxu0 0.0
    %1813 = vmatpush.msra.mxu0 0.0
    %1814 = vmatpush.msra.mxu0 0.0
    %1815 = vmatpush.msra.mxu0 0.0
    %v1816 = vand.u32 %v1709, 4294901760
    %v1817 = vsub.f32 %v1709, %v1816
    %v1818 = vand.u32 %v1817, 4294901760
    %v1819 = vsub.f32 %v1817, %v1818
    %v1820 = vand.u32 %v1819, 4294901760
    %1821 = vmatpush.msra.mxu0 %v1820
    %v1822 = vand.u32 %v1708, 4294901760
    %v1823 = vsub.f32 %v1708, %v1822
    %v1824 = vand.u32 %v1823, 4294901760
    %v1825 = vsub.f32 %v1823, %v1824
    %v1826 = vand.u32 %v1825, 4294901760
    %1827 = vmatpush.msra.mxu0 %v1826
    %v1828 = vand.u32 %v1707, 4294901760
    %v1829 = vsub.f32 %v1707, %v1828
    %v1830 = vand.u32 %v1829, 4294901760
    %v1831 = vsub.f32 %v1829, %v1830
    %v1832 = vand.u32 %v1831, 4294901760
    %1833 = vmatpush.msra.mxu0 %v1832
    %v1834 = vand.u32 %v1706, 4294901760
    %v1835 = vsub.f32 %v1706, %v1834
    %v1836 = vand.u32 %v1835, 4294901760
    %v1837 = vsub.f32 %v1835, %v1836
    %v1838 = vand.u32 %v1837, 4294901760
    %1839 = vmatpush.msra.mxu0 %v1838
    %v1840 = vand.u32 %v1705, 4294901760
    %v1841 = vsub.f32 %v1705, %v1840
    %v1842 = vand.u32 %v1841, 4294901760
    %v1843 = vsub.f32 %v1841, %v1842
    %v1844 = vand.u32 %v1843, 4294901760
    %1845 = vmatpush.msra.mxu0 %v1844
    %v1846 = vand.u32 %v1704, 4294901760
    %v1847 = vsub.f32 %v1704, %v1846
    %v1848 = vand.u32 %v1847, 4294901760
    %v1849 = vsub.f32 %v1847, %v1848
    %v1850 = vand.u32 %v1849, 4294901760
    %1851 = vmatpush.msra.mxu0 %v1850
    %v1852 = vand.u32 %v1703, 4294901760
    %v1853 = vsub.f32 %v1703, %v1852
    %v1854 = vand.u32 %v1853, 4294901760
    %v1855 = vsub.f32 %v1853, %v1854
    %v1856 = vand.u32 %v1855, 4294901760
    %1857 = vmatpush.msra.mxu0 %v1856
    %v1858 = vand.u32 %v1702, 4294901760
    %v1859 = vsub.f32 %v1702, %v1858
    %v1860 = vand.u32 %v1859, 4294901760
    %v1861 = vsub.f32 %v1859, %v1860
    %v1862 = vand.u32 %v1861, 4294901760
    %1863 = vmatpush.msra.mxu0 %v1862
    %v1864 = vand.u32 %v1740, 4294901760
    %1865 = vmatmul.f32.gmra.mxu0 %v1864
    %v1866 = vpop.f32.mrf.mxu0
    %v1867 = vadd.f32 %v1782, %v1866
    %v1868 = vand.u32 %v1743, 4294901760
    %1869 = vmatmul.f32.gmra.mxu0 %v1868
    %v1870 = vpop.f32.mrf.mxu0
    %v1871 = vadd.f32 %v1790, %v1870
    %v1872 = vand.u32 %v1746, 4294901760
    %1873 = vmatmul.f32.gmra.mxu0 %v1872
    %v1874 = vpop.f32.mrf.mxu0
    %v1875 = vadd.f32 %v1798, %v1874
    %v1876 = vand.u32 %v1749, 4294901760
    %1877 = vmatmul.f32.gmra.mxu0 %v1876
    %v1878 = vpop.f32.mrf.mxu0
    %v1879 = vadd.f32 %v1806, %v1878
    %1880 = vdwg.mxu0
    %1881 = vmatpush.msra.mxu0 0.0
    %1882 = vmatpush.msra.mxu0 0.0
    %1883 = vmatpush.msra.mxu0 0.0
    %1884 = vmatpush.msra.mxu0 0.0
    %1885 = vmatpush.msra.mxu0 0.0
    %1886 = vmatpush.msra.mxu0 0.0
    %1887 = vmatpush.msra.mxu0 0.0
    %1888 = vmatpush.msra.mxu0 0.0
    %v1889 = vand.u32 %v1709, 4294901760
    %v1890 = vsub.f32 %v1709, %v1889
    %1891 = vmatpush.msra.mxu0 %v1890
    %v1892 = vand.u32 %v1708, 4294901760
    %v1893 = vsub.f32 %v1708, %v1892
    %1894 = vmatpush.msra.mxu0 %v1893
    %v1895 = vand.u32 %v1707, 4294901760
    %v1896 = vsub.f32 %v1707, %v1895
    %1897 = vmatpush.msra.mxu0 %v1896
    %v1898 = vand.u32 %v1706, 4294901760
    %v1899 = vsub.f32 %v1706, %v1898
    %1900 = vmatpush.msra.mxu0 %v1899
    %v1901 = vand.u32 %v1705, 4294901760
    %v1902 = vsub.f32 %v1705, %v1901
    %1903 = vmatpush.msra.mxu0 %v1902
    %v1904 = vand.u32 %v1704, 4294901760
    %v1905 = vsub.f32 %v1704, %v1904
    %1906 = vmatpush.msra.mxu0 %v1905
    %v1907 = vand.u32 %v1703, 4294901760
    %v1908 = vsub.f32 %v1703, %v1907
    %1909 = vmatpush.msra.mxu0 %v1908
    %v1910 = vand.u32 %v1702, 4294901760
    %v1911 = vsub.f32 %v1702, %v1910
    %1912 = vmatpush.msra.mxu0 %v1911
    %v1913 = vand.u32 %v1740, 4294901760
    %v1914 = vsub.f32 %v1740, %v1913
    %1915 = vmatmul.f32.gmra.mxu0 %v1914
    %v1916 = vpop.f32.mrf.mxu0
    %v1917 = vadd.f32 %v1867, %v1916
    %v1918 = vand.u32 %v1743, 4294901760
    %v1919 = vsub.f32 %v1743, %v1918
    %1920 = vmatmul.f32.gmra.mxu0 %v1919
    %v1921 = vpop.f32.mrf.mxu0
    %v1922 = vadd.f32 %v1871, %v1921
    %v1923 = vand.u32 %v1746, 4294901760
    %v1924 = vsub.f32 %v1746, %v1923
    %1925 = vmatmul.f32.gmra.mxu0 %v1924
    %v1926 = vpop.f32.mrf.mxu0
    %v1927 = vadd.f32 %v1875, %v1926
    %v1928 = vand.u32 %v1749, 4294901760
    %v1929 = vsub.f32 %v1749, %v1928
    %1930 = vmatmul.f32.gmra.mxu0 %v1929
    %v1931 = vpop.f32.mrf.mxu0
    %v1932 = vadd.f32 %v1879, %v1931
    %1933 = vdwg.mxu0
    %1934 = vmatpush.msra.mxu0 0.0
    %1935 = vmatpush.msra.mxu0 0.0
    %1936 = vmatpush.msra.mxu0 0.0
    %1937 = vmatpush.msra.mxu0 0.0
    %1938 = vmatpush.msra.mxu0 0.0
    %1939 = vmatpush.msra.mxu0 0.0
    %1940 = vmatpush.msra.mxu0 0.0
    %1941 = vmatpush.msra.mxu0 0.0
    %v1942 = vand.u32 %v1709, 4294901760
    %1943 = vmatpush.msra.mxu0 %v1942
    %v1944 = vand.u32 %v1708, 4294901760
    %1945 = vmatpush.msra.mxu0 %v1944
    %v1946 = vand.u32 %v1707, 4294901760
    %1947 = vmatpush.msra.mxu0 %v1946
    %v1948 = vand.u32 %v1706, 4294901760
    %1949 = vmatpush.msra.mxu0 %v1948
    %v1950 = vand.u32 %v1705, 4294901760
    %1951 = vmatpush.msra.mxu0 %v1950
    %v1952 = vand.u32 %v1704, 4294901760
    %1953 = vmatpush.msra.mxu0 %v1952
    %v1954 = vand.u32 %v1703, 4294901760
    %1955 = vmatpush.msra.mxu0 %v1954
    %v1956 = vand.u32 %v1702, 4294901760
    %1957 = vmatpush.msra.mxu0 %v1956
    %v1958 = vand.u32 %v1740, 4294901760
    %v1959 = vsub.f32 %v1740, %v1958
    %v1960 = vand.u32 %v1959, 4294901760
    %1961 = vmatmul.f32.gmra.mxu0 %v1960
    %v1962 = vpop.f32.mrf.mxu0
    %v1963 = vadd.f32 %v1917, %v1962
    %v1964 = vand.u32 %v1743, 4294901760
    %v1965 = vsub.f32 %v1743, %v1964
    %v1966 = vand.u32 %v1965, 4294901760
    %1967 = vmatmul.f32.gmra.mxu0 %v1966
    %v1968 = vpop.f32.mrf.mxu0
    %v1969 = vadd.f32 %v1922, %v1968
    %v1970 = vand.u32 %v1746, 4294901760
    %v1971 = vsub.f32 %v1746, %v1970
    %v1972 = vand.u32 %v1971, 4294901760
    %1973 = vmatmul.f32.gmra.mxu0 %v1972
    %v1974 = vpop.f32.mrf.mxu0
    %v1975 = vadd.f32 %v1927, %v1974
    %v1976 = vand.u32 %v1749, 4294901760
    %v1977 = vsub.f32 %v1749, %v1976
    %v1978 = vand.u32 %v1977, 4294901760
    %1979 = vmatmul.f32.gmra.mxu0 %v1978
    %v1980 = vpop.f32.mrf.mxu0
    %v1981 = vadd.f32 %v1932, %v1980
    %1982 = vdwg.mxu0
    %1983 = vmatpush.msra.mxu0 0.0
    %1984 = vmatpush.msra.mxu0 0.0
    %1985 = vmatpush.msra.mxu0 0.0
    %1986 = vmatpush.msra.mxu0 0.0
    %1987 = vmatpush.msra.mxu0 0.0
    %1988 = vmatpush.msra.mxu0 0.0
    %1989 = vmatpush.msra.mxu0 0.0
    %1990 = vmatpush.msra.mxu0 0.0
    %v1991 = vand.u32 %v1709, 4294901760
    %v1992 = vsub.f32 %v1709, %v1991
    %v1993 = vand.u32 %v1992, 4294901760
    %1994 = vmatpush.msra.mxu0 %v1993
    %v1995 = vand.u32 %v1708, 4294901760
    %v1996 = vsub.f32 %v1708, %v1995
    %v1997 = vand.u32 %v1996, 4294901760
    %1998 = vmatpush.msra.mxu0 %v1997
    %v1999 = vand.u32 %v1707, 4294901760
    %v2000 = vsub.f32 %v1707, %v1999
    %v2001 = vand.u32 %v2000, 4294901760
    %2002 = vmatpush.msra.mxu0 %v2001
    %v2003 = vand.u32 %v1706, 4294901760
    %v2004 = vsub.f32 %v1706, %v2003
    %v2005 = vand.u32 %v2004, 4294901760
    %2006 = vmatpush.msra.mxu0 %v2005
    %v2007 = vand.u32 %v1705, 4294901760
    %v2008 = vsub.f32 %v1705, %v2007
    %v2009 = vand.u32 %v2008, 4294901760
    %2010 = vmatpush.msra.mxu0 %v2009
    %v2011 = vand.u32 %v1704, 4294901760
    %v2012 = vsub.f32 %v1704, %v2011
    %v2013 = vand.u32 %v2012, 4294901760
    %2014 = vmatpush.msra.mxu0 %v2013
    %v2015 = vand.u32 %v1703, 4294901760
    %v2016 = vsub.f32 %v1703, %v2015
    %v2017 = vand.u32 %v2016, 4294901760
    %2018 = vmatpush.msra.mxu0 %v2017
    %v2019 = vand.u32 %v1702, 4294901760
    %v2020 = vsub.f32 %v1702, %v2019
    %v2021 = vand.u32 %v2020, 4294901760
    %2022 = vmatpush.msra.mxu0 %v2021
    %v2023 = vand.u32 %v1740, 4294901760
    %2024 = vmatmul.f32.gmra.mxu0 %v2023
    %v2025 = vpop.f32.mrf.mxu0
    %v2026 = vadd.f32 %v1963, %v2025
    %v2027 = vand.u32 %v1743, 4294901760
    %2028 = vmatmul.f32.gmra.mxu0 %v2027
    %v2029 = vpop.f32.mrf.mxu0
    %v2030 = vadd.f32 %v1969, %v2029
    %v2031 = vand.u32 %v1746, 4294901760
    %2032 = vmatmul.f32.gmra.mxu0 %v2031
    %v2033 = vpop.f32.mrf.mxu0
    %v2034 = vadd.f32 %v1975, %v2033
    %v2035 = vand.u32 %v1749, 4294901760
    %2036 = vmatmul.f32.gmra.mxu0 %v2035
    %v2037 = vpop.f32.mrf.mxu0
    %v2038 = vadd.f32 %v1981, %v2037
    %2039 = vdwg.mxu0
    %2040 = vmatpush.msra.mxu0 0.0
    %2041 = vmatpush.msra.mxu0 0.0
    %2042 = vmatpush.msra.mxu0 0.0
    %2043 = vmatpush.msra.mxu0 0.0
    %2044 = vmatpush.msra.mxu0 0.0
    %2045 = vmatpush.msra.mxu0 0.0
    %2046 = vmatpush.msra.mxu0 0.0
    %2047 = vmatpush.msra.mxu0 0.0
    %v2048 = vand.u32 %v1709, 4294901760
    %2049 = vmatpush.msra.mxu0 %v2048
    %v2050 = vand.u32 %v1708, 4294901760
    %2051 = vmatpush.msra.mxu0 %v2050
    %v2052 = vand.u32 %v1707, 4294901760
    %2053 = vmatpush.msra.mxu0 %v2052
    %v2054 = vand.u32 %v1706, 4294901760
    %2055 = vmatpush.msra.mxu0 %v2054
    %v2056 = vand.u32 %v1705, 4294901760
    %2057 = vmatpush.msra.mxu0 %v2056
    %v2058 = vand.u32 %v1704, 4294901760
    %2059 = vmatpush.msra.mxu0 %v2058
    %v2060 = vand.u32 %v1703, 4294901760
    %2061 = vmatpush.msra.mxu0 %v2060
    %v2062 = vand.u32 %v1702, 4294901760
    %2063 = vmatpush.msra.mxu0 %v2062
    %v2064 = vand.u32 %v1740, 4294901760
    %2065 = vmatmul.f32.gmra.mxu0 %v2064
    %v2066 = vpop.f32.mrf.mxu0
    %v2067 = vadd.f32 %v2026, %v2066
    %v2068 = vand.u32 %v1743, 4294901760
    %2069 = vmatmul.f32.gmra.mxu0 %v2068
    %v2070 = vpop.f32.mrf.mxu0
    %v2071 = vadd.f32 %v2030, %v2070
    %v2072 = vand.u32 %v1746, 4294901760
    %2073 = vmatmul.f32.gmra.mxu0 %v2072
    %v2074 = vpop.f32.mrf.mxu0
    %v2075 = vadd.f32 %v2034, %v2074
    %v2076 = vand.u32 %v1749, 4294901760
    %2077 = vmatmul.f32.gmra.mxu0 %v2076
    %v2078 = vpop.f32.mrf.mxu0
    %v2079 = vadd.f32 %v2038, %v2078
    %2080 = vdwg.mxu0
    %v2081 = vmax.f32 %v2067, 0.0
    %v2082 = vmax.f32 %v2071, 0.0
    %v2083 = vmax.f32 %v2075, 0.0
    %v2084 = vmax.f32 %v2079, 0.0
    %v2085 = vld [vmem:[%s7] sm:$0xff]
    %v2086 = vld [vmem:[%s7 + $0x8] sm:$0xff]
    %v2087 = vld [vmem:[%s8] sm:$0xff]
    %v2088 = vld [vmem:[%s8 + $0x8] sm:$0xff]
    %2090 = vset.pattern.permute.xlu0 0
    %2091 = vperm.xlu0 %2090, %v2087
    %v2092 = vpop.permute.xlu0 %2091
    %2095 = vset.pattern.permute.xlu0 0
    %2096 = vperm.xlu0 %2095, %v2088
    %v2097 = vpop.permute.xlu0 %2096
    %vm2099 = vcmask 261120
    %v2101 = vsel %vm2099, %v2085, 0
    %v2104 = vsel %vm2099, %v2086, 0
    %2106 = vmatpush.msra.mxu0 0.0
    %2107 = vmatpush.msra.mxu0 0.0
    %2108 = vmatpush.msra.mxu0 0.0
    %2109 = vmatpush.msra.mxu0 0.0
    %2110 = vmatpush.msra.mxu0 0.0
    %2111 = vmatpush.msra.mxu0 0.0
    %2112 = vmatpush.msra.mxu0 0.0
    %2113 = vmatpush.msra.mxu0 0.0
    %2114 = vmatpush.msra.mxu0 0.0
    %2115 = vmatpush.msra.mxu0 0.0
    %2116 = vmatpush.msra.mxu0 0.0
    %2117 = vmatpush.msra.mxu0 0.0
    %v2118 = vand.u32 %v2084, 4294901760
    %2119 = vmatpush.msra.mxu0 %v2118
    %v2120 = vand.u32 %v2083, 4294901760
    %2121 = vmatpush.msra.mxu0 %v2120
    %v2122 = vand.u32 %v2082, 4294901760
    %2123 = vmatpush.msra.mxu0 %v2122
    %v2124 = vand.u32 %v2081, 4294901760
    %2125 = vmatpush.msra.mxu0 %v2124
    %v2126 = vand.u32 %v2101, 4294901760
    %v2127 = vsub.f32 %v2101, %v2126
    %v2128 = vand.u32 %v2127, 4294901760
    %v2129 = vsub.f32 %v2127, %v2128
    %v2130 = vand.u32 %v2129, 4294901760
    %2131 = vmatmul.f32.gmra.mxu0 %v2130
    %v2132 = vpop.f32.mrf.mxu0
    %v2133 = vadd.f32 %v2092, %v2132
    %v2134 = vand.u32 %v2104, 4294901760
    %v2135 = vsub.f32 %v2104, %v2134
    %v2136 = vand.u32 %v2135, 4294901760
    %v2137 = vsub.f32 %v2135, %v2136
    %v2138 = vand.u32 %v2137, 4294901760
    %2139 = vmatmul.f32.gmra.mxu0 %v2138
    %v2140 = vpop.f32.mrf.mxu0
    %v2141 = vadd.f32 %v2097, %v2140
    %2142 = vdwg.mxu0
    %2143 = vmatpush.msra.mxu0 0.0
    %2144 = vmatpush.msra.mxu0 0.0
    %2145 = vmatpush.msra.mxu0 0.0
    %2146 = vmatpush.msra.mxu0 0.0
    %2147 = vmatpush.msra.mxu0 0.0
    %2148 = vmatpush.msra.mxu0 0.0
    %2149 = vmatpush.msra.mxu0 0.0
    %2150 = vmatpush.msra.mxu0 0.0
    %2151 = vmatpush.msra.mxu0 0.0
    %2152 = vmatpush.msra.mxu0 0.0
    %2153 = vmatpush.msra.mxu0 0.0
    %2154 = vmatpush.msra.mxu0 0.0
    %v2155 = vand.u32 %v2084, 4294901760
    %v2156 = vsub.f32 %v2084, %v2155
    %v2157 = vand.u32 %v2156, 4294901760
    %v2158 = vsub.f32 %v2156, %v2157
    %v2159 = vand.u32 %v2158, 4294901760
    %2160 = vmatpush.msra.mxu0 %v2159
    %v2161 = vand.u32 %v2083, 4294901760
    %v2162 = vsub.f32 %v2083, %v2161
    %v2163 = vand.u32 %v2162, 4294901760
    %v2164 = vsub.f32 %v2162, %v2163
    %v2165 = vand.u32 %v2164, 4294901760
    %2166 = vmatpush.msra.mxu0 %v2165
    %v2167 = vand.u32 %v2082, 4294901760
    %v2168 = vsub.f32 %v2082, %v2167
    %v2169 = vand.u32 %v2168, 4294901760
    %v2170 = vsub.f32 %v2168, %v2169
    %v2171 = vand.u32 %v2170, 4294901760
    %2172 = vmatpush.msra.mxu0 %v2171
    %v2173 = vand.u32 %v2081, 4294901760
    %v2174 = vsub.f32 %v2081, %v2173
    %v2175 = vand.u32 %v2174, 4294901760
    %v2176 = vsub.f32 %v2174, %v2175
    %v2177 = vand.u32 %v2176, 4294901760
    %2178 = vmatpush.msra.mxu0 %v2177
    %v2179 = vand.u32 %v2101, 4294901760
    %2180 = vmatmul.f32.gmra.mxu0 %v2179
    %v2181 = vpop.f32.mrf.mxu0
    %v2182 = vadd.f32 %v2133, %v2181
    %v2183 = vand.u32 %v2104, 4294901760
    %2184 = vmatmul.f32.gmra.mxu0 %v2183
    %v2185 = vpop.f32.mrf.mxu0
    %v2186 = vadd.f32 %v2141, %v2185
    %2187 = vdwg.mxu0
    %2188 = vmatpush.msra.mxu0 0.0
    %2189 = vmatpush.msra.mxu0 0.0
    %2190 = vmatpush.msra.mxu0 0.0
    %2191 = vmatpush.msra.mxu0 0.0
    %2192 = vmatpush.msra.mxu0 0.0
    %2193 = vmatpush.msra.mxu0 0.0
    %2194 = vmatpush.msra.mxu0 0.0
    %2195 = vmatpush.msra.mxu0 0.0
    %2196 = vmatpush.msra.mxu0 0.0
    %2197 = vmatpush.msra.mxu0 0.0
    %2198 = vmatpush.msra.mxu0 0.0
    %2199 = vmatpush.msra.mxu0 0.0
    %v2200 = vand.u32 %v2084, 4294901760
    %v2201 = vsub.f32 %v2084, %v2200
    %2202 = vmatpush.msra.mxu0 %v2201
    %v2203 = vand.u32 %v2083, 4294901760
    %v2204 = vsub.f32 %v2083, %v2203
    %2205 = vmatpush.msra.mxu0 %v2204
    %v2206 = vand.u32 %v2082, 4294901760
    %v2207 = vsub.f32 %v2082, %v2206
    %2208 = vmatpush.msra.mxu0 %v2207
    %v2209 = vand.u32 %v2081, 4294901760
    %v2210 = vsub.f32 %v2081, %v2209
    %2211 = vmatpush.msra.mxu0 %v2210
    %v2212 = vand.u32 %v2101, 4294901760
    %v2213 = vsub.f32 %v2101, %v2212
    %2214 = vmatmul.f32.gmra.mxu0 %v2213
    %v2215 = vpop.f32.mrf.mxu0
    %v2216 = vadd.f32 %v2182, %v2215
    %v2217 = vand.u32 %v2104, 4294901760
    %v2218 = vsub.f32 %v2104, %v2217
    %2219 = vmatmul.f32.gmra.mxu0 %v2218
    %v2220 = vpop.f32.mrf.mxu0
    %v2221 = vadd.f32 %v2186, %v2220
    %2222 = vdwg.mxu0
    %2223 = vmatpush.msra.mxu0 0.0
    %2224 = vmatpush.msra.mxu0 0.0
    %2225 = vmatpush.msra.mxu0 0.0
    %2226 = vmatpush.msra.mxu0 0.0
    %2227 = vmatpush.msra.mxu0 0.0
    %2228 = vmatpush.msra.mxu0 0.0
    %2229 = vmatpush.msra.mxu0 0.0
    %2230 = vmatpush.msra.mxu0 0.0
    %2231 = vmatpush.msra.mxu0 0.0
    %2232 = vmatpush.msra.mxu0 0.0
    %2233 = vmatpush.msra.mxu0 0.0
    %2234 = vmatpush.msra.mxu0 0.0
    %v2235 = vand.u32 %v2084, 4294901760
    %2236 = vmatpush.msra.mxu0 %v2235
    %v2237 = vand.u32 %v2083, 4294901760
    %2238 = vmatpush.msra.mxu0 %v2237
    %v2239 = vand.u32 %v2082, 4294901760
    %2240 = vmatpush.msra.mxu0 %v2239
    %v2241 = vand.u32 %v2081, 4294901760
    %2242 = vmatpush.msra.mxu0 %v2241
    %v2243 = vand.u32 %v2101, 4294901760
    %v2244 = vsub.f32 %v2101, %v2243
    %v2245 = vand.u32 %v2244, 4294901760
    %2246 = vmatmul.f32.gmra.mxu0 %v2245
    %v2247 = vpop.f32.mrf.mxu0
    %v2248 = vadd.f32 %v2216, %v2247
    %v2249 = vand.u32 %v2104, 4294901760
    %v2250 = vsub.f32 %v2104, %v2249
    %v2251 = vand.u32 %v2250, 4294901760
    %2252 = vmatmul.f32.gmra.mxu0 %v2251
    %v2253 = vpop.f32.mrf.mxu0
    %v2254 = vadd.f32 %v2221, %v2253
    %2255 = vdwg.mxu0
    %2256 = vmatpush.msra.mxu0 0.0
    %2257 = vmatpush.msra.mxu0 0.0
    %2258 = vmatpush.msra.mxu0 0.0
    %2259 = vmatpush.msra.mxu0 0.0
    %2260 = vmatpush.msra.mxu0 0.0
    %2261 = vmatpush.msra.mxu0 0.0
    %2262 = vmatpush.msra.mxu0 0.0
    %2263 = vmatpush.msra.mxu0 0.0
    %2264 = vmatpush.msra.mxu0 0.0
    %2265 = vmatpush.msra.mxu0 0.0
    %2266 = vmatpush.msra.mxu0 0.0
    %2267 = vmatpush.msra.mxu0 0.0
    %v2268 = vand.u32 %v2084, 4294901760
    %v2269 = vsub.f32 %v2084, %v2268
    %v2270 = vand.u32 %v2269, 4294901760
    %2271 = vmatpush.msra.mxu0 %v2270
    %v2272 = vand.u32 %v2083, 4294901760
    %v2273 = vsub.f32 %v2083, %v2272
    %v2274 = vand.u32 %v2273, 4294901760
    %2275 = vmatpush.msra.mxu0 %v2274
    %v2276 = vand.u32 %v2082, 4294901760
    %v2277 = vsub.f32 %v2082, %v2276
    %v2278 = vand.u32 %v2277, 4294901760
    %2279 = vmatpush.msra.mxu0 %v2278
    %v2280 = vand.u32 %v2081, 4294901760
    %v2281 = vsub.f32 %v2081, %v2280
    %v2282 = vand.u32 %v2281, 4294901760
    %2283 = vmatpush.msra.mxu0 %v2282
    %v2284 = vand.u32 %v2101, 4294901760
    %2285 = vmatmul.f32.gmra.mxu0 %v2284
    %v2286 = vpop.f32.mrf.mxu0
    %v2287 = vadd.f32 %v2248, %v2286
    %v2288 = vand.u32 %v2104, 4294901760
    %2289 = vmatmul.f32.gmra.mxu0 %v2288
    %v2290 = vpop.f32.mrf.mxu0
    %v2291 = vadd.f32 %v2254, %v2290
    %2292 = vdwg.mxu0
    %2293 = vmatpush.msra.mxu0 0.0
    %2294 = vmatpush.msra.mxu0 0.0
    %2295 = vmatpush.msra.mxu0 0.0
    %2296 = vmatpush.msra.mxu0 0.0
    %2297 = vmatpush.msra.mxu0 0.0
    %2298 = vmatpush.msra.mxu0 0.0
    %2299 = vmatpush.msra.mxu0 0.0
    %2300 = vmatpush.msra.mxu0 0.0
    %2301 = vmatpush.msra.mxu0 0.0
    %2302 = vmatpush.msra.mxu0 0.0
    %2303 = vmatpush.msra.mxu0 0.0
    %2304 = vmatpush.msra.mxu0 0.0
    %v2305 = vand.u32 %v2084, 4294901760
    %2306 = vmatpush.msra.mxu0 %v2305
    %v2307 = vand.u32 %v2083, 4294901760
    %2308 = vmatpush.msra.mxu0 %v2307
    %v2309 = vand.u32 %v2082, 4294901760
    %2310 = vmatpush.msra.mxu0 %v2309
    %v2311 = vand.u32 %v2081, 4294901760
    %2312 = vmatpush.msra.mxu0 %v2311
    %v2313 = vand.u32 %v2101, 4294901760
    %2314 = vmatmul.f32.gmra.mxu0 %v2313
    %v2315 = vpop.f32.mrf.mxu0
    %v2316 = vadd.f32 %v2287, %v2315
    %v2317 = vand.u32 %v2104, 4294901760
    %2318 = vmatmul.f32.gmra.mxu0 %v2317
    %v2319 = vpop.f32.mrf.mxu0
    %v2320 = vadd.f32 %v2291, %v2319
    %2321 = vdwg.mxu0
    %v2322 = vmax.f32 %v2316, 0.0
    %v2323 = vmax.f32 %v2320, 0.0
    %v2324 = vld [vmem:[%s9] sm:$0xff]
    %v2325 = vld [vmem:[%s9 + $0x8] sm:$0xff]
    %2327 = vset.pattern.permute.xlu0 0
    %2328 = vperm.xlu0 %2327, %v2324
    %v2329 = vpop.permute.xlu0 %2328
    %2332 = vset.pattern.permute.xlu0 0
    %2333 = vperm.xlu0 %2332, %v2325
    %v2334 = vpop.permute.xlu0 %2333
    %v2336 = vmul.f32 %v2329, %v2322
    %v2337 = vmul.f32 %v2334, %v2323
    %v2338 = vadd.f32 %v2336, %v2337
    %v2339 = vrot.slane %v2338, 4
    %v2340 = vadd.f32 %v2338, %v2339
    %v2341 = vrot.slane %v2340, 2
    %v2342 = vadd.f32 %v2340, %v2341
    %v2343 = vrot.slane %v2342, 1
    %v2344 = vadd.f32 %v2342, %v2343
    %v2345 = vld [vmem:[#allocation2] sm:$0x1]
    %2347 = vset.pattern.permute.xlu0 0
    %2348 = vperm.xlu0 %2347, %v2345
    %v2349 = vpop.permute.xlu0 %2348
    %v2351 = vperm.slane %v2349, 0
    %v2352 = vadd.f32 %v2344, %v2351
    %v2353 = vsub.f32 0.0, %v2352
    %v2354 = vmul.f32 %v2353, 1.442695
    %v2355 = vpow.pop %v2354
    %v2356 = vadd.f32 %v2355, 1.0
    %v2357 = vrcp.pop %v2356
    %v2358 = vmul.f32 %v2356, %v2357
    %v2359 = vsub.f32 1.0, %v2358
    %v2360 = vmul.f32 %v2357, %v2359
    %v2361 = vadd.f32 %v2357, %v2360
    %vm2362 = vweird.f32 %v2356
    %vm2363 = vweird.f32 %v2357
    %vm2364 = vmor %vm2362, %vm2363
    %v2365 = vsel %vm2364, %v2357, %v2361
    %v2366 = vand.u32 2147483647, %v2356
    %vm2367 = vcmp.eq.f32.partialorder %v2366, 8.507059e+37
    %v2368 = vand.u32 %v2356, 2147483648
    %v2369 = vor.u32 1.1754944e-38, %v2368
    %v2370 = vsel %vm2367, %v2369, %v2365
    %v2371 = vmul.f32 1.0, %v2370
    %2372 = vst [vmem:[#allocation3] sm:$0x1] %v2371
    // Predicated region
    $region46: #{tennis_net_forward.1} parent=1 // pred_check
      _
    $region47: #{tennis_net_forward.1} parent=1 // pred_check_branch
      %2374 = sbr.rel (0) target = $region49
    $region48: #{tennis_net_forward.1} parent=1 // pred_region
      %2376 = vsyncadd [#allocation4], 0
      %s2378 = sshll.u32 [#allocation3], 4
      %s2379 = int_to_ptr.vmem [resolvable:$true] %s2378
      %s2380 = sshll.u32 %s11, 4
      %s2381 = int_to_ptr.hbm [resolvable:$true] %s2380
      %2383 = dma.vmem_to_hbm [thread:$0]  %s2379, 16, %s2381, [#allocation4]
    $region49: #{tennis_net_forward.1} parent=1 // pred_fallthru
      _
    // Predicated region
    $region50: #{tennis_net_forward.1} parent=1 // pred_check
      _
    $region51: #{tennis_net_forward.1} parent=1 // pred_check_branch
      %2385 = sbr.rel (0) target = $region53
    $region52: #{tennis_net_forward.1} parent=1 // pred_region
      %2387 = dma.done [#allocation4], 16
    $region53: #{tennis_net_forward.1} parent=1 // pred_fallthru
      _
    %2388 = vsyncpa [#allocation4], 1

</llo_original>
